<compile_context>
chip_gen: v7x
topology: tpu7x:2x2x1
jax: 0.10.0
libtpu: 0.0.40
codegen_flags: <defaults>
</compile_context>

<pallas_src>
import functools
import math

import jax
import jax.numpy as jnp
from jax.experimental import pallas as pl
from jax.experimental.pallas import tpu as pltpu


_VMEM_LIMIT = 48 * 1024 * 1024   # explicit scoped-VMEM budget (fits v7x 64 MiB/TC)


# ----------------------------------------------------------------------------
# RoPE tables (parameter-free glue, computed once in plain JAX).
# ----------------------------------------------------------------------------
def rope_tables(s, d, base=10000.0, dtype=jnp.float32):
    """(sin, cos) of shape (s, d//2) under the pair-broadcast interpretation."""
    half_d = d // 2
    pos = jnp.arange(s, dtype=dtype)[:, None]                    # (s, 1)
    freq_seq = jnp.arange(0, half_d, 2, dtype=dtype)             # (half_d // 2,)
    inv_freq = 1.0 / (base ** (freq_seq / half_d))
    angles = pos * inv_freq[None, :]                             # (s, half_d // 2)
    # TODO(synk): the reference rope_fn reshapes x1 of shape (b, s, half_d) to
    # (b, s, half_d // 2, 1), which is element-count inconsistent.  We use the
    # consistent interpretation: each angle is shared by a consecutive pair of
    # elements of x1 / x2 (broadcast over a trailing 2).
    sin = jnp.repeat(jnp.sin(angles), 2, axis=-1)                # (s, half_d)
    cos = jnp.repeat(jnp.cos(angles), 2, axis=-1)
    return sin, cos


def rope_tables_full(s, d, base=10000.0, dtype=jnp.float32):
    """Full-width tables with the rotation sign baked in so the kernel computes
    rot(t) = t * cos_full + roll(t, d//2) * sin_signed  (no slice/concat)."""
    sin, cos = rope_tables(s, d, base, dtype)
    cos_full = jnp.concatenate([cos, cos], axis=-1)              # (s, d)
    sin_signed = jnp.concatenate([-sin, sin], axis=-1)           # (s, d)
    return cos_full, sin_signed


# ----------------------------------------------------------------------------
# Stage 1 kernel: QKV projection + RoPE (+ q pre-scaling).
# ----------------------------------------------------------------------------
def _qkv_rope_kernel(x_ref, cos_ref, sin_ref,
                     wq_ref, bq_ref, wk_ref, bk_ref, wv_ref, bv_ref,
                     q_ref, k_ref, v_ref, *, half_d, scale):
    x = x_ref[...].astype(jnp.bfloat16)          # bf16 only at the MXU inputs
    cos_f = cos_ref[...]                         # (TS, D) f32
    sin_s = sin_ref[...]                         # (TS, D) f32 (sign baked in)

    def linear(w_ref, b_ref):
        return (jnp.dot(x, w_ref[...], preferred_element_type=jnp.float32)
                + b_ref[...])

    def rope(t):                                 # f32 in / f32 out
        return t * cos_f + pltpu.roll(t, shift=half_d, axis=1) * sin_s

    q_ref[...] = (rope(linear(wq_ref, bq_ref)) * scale).astype(q_ref.dtype)
    k_ref[...] = rope(linear(wk_ref, bk_ref)).astype(k_ref.dtype)
    v_ref[...] = linear(wv_ref, bv_ref).astype(v_ref.dtype)


# ----------------------------------------------------------------------------
# Stage 2 kernel: flash attention + out-proj + LN1 + hidden-tiled MLP + LN2.
# ----------------------------------------------------------------------------
def _flash_attn_mlp_kernel(x_ref, q_ref, k_ref, v_ref,
                           wo_ref, bo_ref, g1_ref, be1_ref,
                           w1_ref, b1_ref, w2_ref, b2_ref, g2_ref, be2_ref,
                           out_ref, m_ref, l_ref, acc_ref,
                           *, block_mlp, eps):
    ki = pl.program_id(2)
    nk = pl.num_programs(2)

    @pl.when(ki == 0)
    def _():
        m_ref[...] = jnp.full(m_ref.shape, -jnp.inf, m_ref.dtype)
        l_ref[...] = jnp.zeros(l_ref.shape, l_ref.dtype)
        acc_ref[...] = jnp.zeros(acc_ref.shape, acc_ref.dtype)

    q = q_ref[...]                               # (H, TQ, dh) bf16, pre-scaled
    k = k_ref[...]                               # (H, TKV, dh) bf16
    v = v_ref[...]                               # (H, TKV, dh) bf16

    # Scores for all heads in one batched dot: 'hqd,hkd->hqk' (no k transpose).
    sc = jax.lax.dot_general(q, k, (((2,), (2,)), ((0,), (0,))),
                             preferred_element_type=jnp.float32)  # (H,TQ,TKV)

    m_prev = m_ref[...]                                           # (H, TQ, 1)
    m_new = jnp.maximum(m_prev, jnp.max(sc, axis=-1, keepdims=True))
    alpha = jnp.exp(m_prev - m_new)
    prob = jnp.exp(sc - m_new)
    l_ref[...] = alpha * l_ref[...] + jnp.sum(prob, axis=-1, keepdims=True)
    # Context update, all heads batched: 'hqk,hkd->hqd'.
    acc_ref[...] = alpha * acc_ref[...] + jax.lax.dot_general(
        prob.astype(v.dtype), v, (((2,), (1,)), ((0,), (0,))),
        preferred_element_type=jnp.float32)                       # (H, TQ, dh)
    m_ref[...] = m_new

    @pl.when(ki == nk - 1)
    def _():
        x_t = x_ref[...]                                          # (TQ, D) f32
        tq, d = x_t.shape
        # Softmax normalization on the EUP slot (approx reciprocal, no divide).
        ctx = acc_ref[...] * pl.reciprocal(l_ref[...], approx=True)

        # Output projection without rebuilding a (TQ, D) head-concat:
        # 'hqd,hde->hqe' (batched over heads), then sum over heads.
        attn_h = jax.lax.dot_general(
            ctx.astype(jnp.bfloat16), wo_ref[...],
            (((2,), (1,)), ((0,), (0,))),
            preferred_element_type=jnp.float32)                   # (H, TQ, D)
        attn = jnp.sum(attn_h, axis=0) + bo_ref[...]              # (TQ, D)

        def layer_norm(t, g_r, b_r):
            mu = jnp.mean(t, axis=-1, keepdims=True)
            var = jnp.mean(jnp.square(t - mu), axis=-1, keepdims=True)
            return (t - mu) * jax.lax.rsqrt(var + eps) * g_r[...] + b_r[...]

        h1 = layer_norm(x_t + attn, g1_ref, be1_ref)              # (TQ, D) f32
        h1b = h1.astype(jnp.bfloat16)

        # MLP with the hidden dim tiled so only (TQ, block_mlp) is ever live.
        hidden = w1_ref.shape[1]
        mlp = jnp.zeros((tq, d), jnp.float32)
        for c in range(hidden // block_mlp):                      # static unroll
            lo = c * block_mlp
            hc = (jnp.dot(h1b, w1_ref[:, lo:lo + block_mlp],
                          preferred_element_type=jnp.float32)
                  + b1_ref[:, lo:lo + block_mlp])
            hc = jnp.maximum(hc, 0.0).astype(jnp.bfloat16)        # ReLU
            mlp = mlp + jnp.dot(hc, w2_ref[lo:lo + block_mlp, :],
                                preferred_element_type=jnp.float32)
        mlp = mlp + b2_ref[...]
        out_ref[...] = layer_norm(x_t + mlp, g2_ref, be2_ref).astype(out_ref.dtype)


# ----------------------------------------------------------------------------
# Wrapper: two pallas_calls + wrapper-side layout plumbing.
# ----------------------------------------------------------------------------
def transformer_block(x, params, *, num_heads, num_groups,
                      block_q=256, block_kv=256, block_proj=256, block_mlp=512,
                      eps=1e-5):
    assert num_heads == num_groups, (
        "Reference einsum contracts qdim against kvdim; it only type-checks "
        "when num_heads == num_groups.")
    b, s, d = x.shape
    assert d % num_heads == 0 and d % 2 == 0 and (d // 2) % 2 == 0
    dh = d // num_heads
    hidden_dim = params["w1"].shape[1]

    block_proj = min(block_proj, s)
    block_q = min(block_q, s)
    block_kv = min(block_kv, s)
    block_mlp = min(block_mlp, hidden_dim)
    assert s % block_proj == 0 and s % block_q == 0 and s % block_kv == 0
    assert hidden_dim % block_mlp == 0

    bf16 = jnp.bfloat16
    p = params
    cos_full, sin_signed = rope_tables_full(s, d, dtype=jnp.float32)

    def _const(shape):
        nd = len(shape)
        return pl.BlockSpec(shape, lambda *_: (0,) * nd)          # weights / tables

    # ---- Stage 1: fused QKV projection + RoPE (+ q pre-scaling). ------------
    qkv_kernel = functools.partial(
        _qkv_rope_kernel, half_d=d // 2, scale=1.0 / math.sqrt(dh))
    seq_spec = pl.BlockSpec((None, block_proj, d), lambda bi, si: (bi, si, 0))
    tab_spec = pl.BlockSpec((block_proj, d), lambda bi, si: (si, 0))

    q, k, v = pl.pallas_call(
        qkv_kernel,
        grid=(b, s // block_proj),
        in_specs=[seq_spec, tab_spec, tab_spec,
                  _const((d, d)), _const((1, d)),
                  _const((d, d)), _const((1, d)),
                  _const((d, d)), _const((1, d))],
        out_specs=(seq_spec, seq_spec, seq_spec),
        out_shape=(jax.ShapeDtypeStruct((b, s, d), bf16),) * 3,
        compiler_params=pltpu.CompilerParams(
            dimension_semantics=("parallel", "parallel"),
            vmem_limit_bytes=_VMEM_LIMIT),
    )(x, cos_full, sin_signed,
      p["wq"].astype(bf16), p["bq"], p["wk"].astype(bf16), p["bk"],
      p["wv"].astype(bf16), p["bv"])

    # ---- Wrapper-side layout plumbing (plain XLA, keeps kernels transpose-free).
    def to_heads(t):
        return t.reshape(b, s, num_heads, dh).transpose(0, 2, 1, 3)  # (B,H,S,dh)

    q_hm, k_hm, v_hm = to_heads(q), to_heads(k), to_heads(v)
    wo_hm = p["wo"].reshape(num_heads, dh, d).astype(bf16)           # (H,dh,D)

    # ---- Stage 2: flash attention + out-proj + LN1 + tiled MLP + LN2. -------
    attn_kernel = functools.partial(
        _flash_attn_mlp_kernel, block_mlp=block_mlp, eps=eps)
    n_q, n_k = s // block_q, s // block_kv
    x_spec = pl.BlockSpec((None, block_q, d), lambda bi, qi, ki: (bi, qi, 0))
    q_spec = pl.BlockSpec((None, num_heads, block_q, dh),
                          lambda bi, qi, ki: (bi, 0, qi, 0))
    kv_spec = pl.BlockSpec((None, num_heads, block_kv, dh),
                           lambda bi, qi, ki: (bi, 0, ki, 0))

    return pl.pallas_call(
        attn_kernel,
        grid=(b, n_q, n_k),
        in_specs=[x_spec, q_spec, kv_spec, kv_spec,
                  _const((num_heads, dh, d)), _const((1, d)),
                  _const((1, d)), _const((1, d)),
                  _const((d, hidden_dim)), _const((1, hidden_dim)),
                  _const((hidden_dim, d)), _const((1, d)),
                  _const((1, d)), _const((1, d))],
        out_specs=x_spec,
        out_shape=jax.ShapeDtypeStruct((b, s, d), x.dtype),
        scratch_shapes=[
            pltpu.VMEM((num_heads, block_q, 1), jnp.float32),   # running max
            pltpu.VMEM((num_heads, block_q, 1), jnp.float32),   # running sum
            pltpu.VMEM((num_heads, block_q, dh), jnp.float32),  # context acc
        ],
        compiler_params=pltpu.CompilerParams(
            dimension_semantics=("parallel", "parallel", "arbitrary"),
            vmem_limit_bytes=_VMEM_LIMIT),
    )(x, q_hm, k_hm, v_hm, wo_hm, p["bo"], p["g1"], p["be1"],
      p["w1"].astype(bf16), p["b1"], p["w2"].astype(bf16), p["b2"],
      p["g2"], p["be2"])


# ----------------------------------------------------------------------------
# Deterministic parameter initialization (mimics nn.Linear / nn.LayerNorm).
# ----------------------------------------------------------------------------
def init_params(key, emb_dim, hidden_dim):
    keys = jax.random.split(key, 12)

    def linear_init(kw, kb, fan_in, fan_out):
        bound = 1.0 / math.sqrt(fan_in)
        w = jax.random.uniform(kw, (fan_in, fan_out), jnp.float32, -bound, bound)
        bias = jax.random.uniform(kb, (1, fan_out), jnp.float32, -bound, bound)
        return w, bias

    wq, bq = linear_init(keys[0], keys[1], emb_dim, emb_dim)
    wk, bk = linear_init(keys[2], keys[3], emb_dim, emb_dim)
    wv, bv = linear_init(keys[4], keys[5], emb_dim, emb_dim)
    wo, bo = linear_init(keys[6], keys[7], emb_dim, emb_dim)
    w1, b1 = linear_init(keys[8], keys[9], emb_dim, hidden_dim)
    w2, b2 = linear_init(keys[10], keys[11], hidden_dim, emb_dim)
    ones = jnp.ones((1, emb_dim), jnp.float32)
    zeros = jnp.zeros((1, emb_dim), jnp.float32)
    return dict(wq=wq, bq=bq, wk=wk, bk=bk, wv=wv, bv=bv, wo=wo, bo=bo,
                w1=w1, b1=b1, w2=w2, b2=b2,
                g1=ones, be1=zeros, g2=ones, be2=zeros)


# ----------------------------------------------------------------------------
# Pure-JAX (f32) reference for validation.
# ----------------------------------------------------------------------------
def reference(x, p, num_heads, eps=1e-5):
    b, s, d = x.shape
    half_d = d // 2
    sin, cos = rope_tables(s, d, dtype=x.dtype)

    def lin(t, w, bb):
        return t @ w + bb

    def rope(t):
        t1, t2 = t[..., :half_d], t[..., half_d:]
        return jnp.concatenate([t1 * cos - t2 * sin, t2 * cos + t1 * sin], axis=-1)

    q = rope(lin(x, p["wq"], p["bq"]))
    k = rope(lin(x, p["wk"], p["bk"]))
    v = lin(x, p["wv"], p["bv"])

    dh = d // num_heads
    qh = q.reshape(b, s, num_heads, dh).transpose(0, 2, 1, 3)
    kh = k.reshape(b, s, num_heads, dh).transpose(0, 2, 1, 3)
    vh = v.reshape(b, s, num_heads, dh).transpose(0, 2, 1, 3)
    e = jnp.einsum("bhqd,bhkd->bhqk", qh, kh) / math.sqrt(dh)
    a = jax.nn.softmax(e, axis=-1)
    o = jnp.einsum("bhqk,bhkd->bhqd", a, vh).transpose(0, 2, 1, 3).reshape(b, s, d)
    attn = lin(o, p["wo"], p["bo"])

    def ln(t, g, be):
        mu = t.mean(-1, keepdims=True)
        var = ((t - mu) ** 2).mean(-1, keepdims=True)
        return (t - mu) / jnp.sqrt(var + eps) * g + be

    h1 = ln(x + attn, p["g1"], p["be1"])
    m = jnp.maximum(lin(h1, p["w1"], p["b1"]), 0.0)
    m = lin(m, p["w2"], p["b2"])
    return ln(x + m, p["g2"], p["be2"])


if __name__ == "__main__":
    # Small but lane-dense shapes (D multiple of 128) so stores are unmasked.
    B, S = 2, 128
    EMB_DIM, HIDDEN_DIM = 128, 256
    NUM_HEADS = NUM_GROUPS = 4       # reference einsum requires heads == groups

    key = jax.random.PRNGKey(0)
    kx, kp = jax.random.split(key)
    x = jax.random.normal(kx, (B, S, EMB_DIM), jnp.float32)
    params = init_params(kp, EMB_DIM, HIDDEN_DIM)

    out = transformer_block(
        x, params, num_heads=NUM_HEADS, num_groups=NUM_GROUPS,
        block_q=64, block_kv=64, block_proj=64, block_mlp=128)
    out = jax.block_until_ready(out)

    ref = reference(x, params, NUM_HEADS)
    assert out.shape == (B, S, EMB_DIM)
    err = float(jnp.max(jnp.abs(out - ref)))
    # bf16 MXU inputs vs. an all-f32 reference -> bf16-appropriate tolerance.
    assert jnp.allclose(out, ref, atol=3e-2, rtol=3e-2), f"max abs err {err}"
    print("KERNEL_OK")
</pallas_src>

<mosaic_0001>
module attributes {stable_mosaic.version = 11 : i64} {
  func.func @_qkv_rope_kernel(%arg0: i32, %arg1: i32, %arg2: memref<1x64x128xf32, #tpu.memory_space<vmem>>, %arg3: memref<64x128xf32, #tpu.memory_space<vmem>>, %arg4: memref<64x128xf32, #tpu.memory_space<vmem>>, %arg5: memref<128x128xbf16, #tpu.memory_space<vmem>>, %arg6: memref<1x128xf32, #tpu.memory_space<vmem>>, %arg7: memref<128x128xbf16, #tpu.memory_space<vmem>>, %arg8: memref<1x128xf32, #tpu.memory_space<vmem>>, %arg9: memref<128x128xbf16, #tpu.memory_space<vmem>>, %arg10: memref<1x128xf32, #tpu.memory_space<vmem>>, %arg11: memref<1x64x128xbf16, #tpu.memory_space<vmem>>, %arg12: memref<1x64x128xbf16, #tpu.memory_space<vmem>>, %arg13: memref<1x64x128xbf16, #tpu.memory_space<vmem>>) attributes {dimension_semantics = [#tpu.dimension_semantics<parallel>, #tpu.dimension_semantics<parallel>], iteration_bounds = array<i64: 2, 2>, scalar_prefetch = 0 : i64, scratch_operands = 0 : i64, tpu.core_type = #tpu.core_type<tc>, window_params = [{transform_indices = @transform_0, window_bounds = array<i64: 1, 64, 128>}, {transform_indices = @transform_1, window_bounds = array<i64: 64, 128>}, {transform_indices = @transform_2, window_bounds = array<i64: 64, 128>}, {pipeline_mode = #tpu.pipeline_mode<synchronous>, transform_indices = @transform_3, window_bounds = array<i64: 128, 128>}, {pipeline_mode = #tpu.pipeline_mode<synchronous>, transform_indices = @transform_4, window_bounds = array<i64: 1, 128>}, {pipeline_mode = #tpu.pipeline_mode<synchronous>, transform_indices = @transform_5, window_bounds = array<i64: 128, 128>}, {pipeline_mode = #tpu.pipeline_mode<synchronous>, transform_indices = @transform_6, window_bounds = array<i64: 1, 128>}, {pipeline_mode = #tpu.pipeline_mode<synchronous>, transform_indices = @transform_7, window_bounds = array<i64: 128, 128>}, {pipeline_mode = #tpu.pipeline_mode<synchronous>, transform_indices = @transform_8, window_bounds = array<i64: 1, 128>}, {transform_indices = @transform_9, window_bounds = array<i64: 1, 64, 128>}, {transform_indices = @transform_10, window_bounds = array<i64: 1, 64, 128>}, {transform_indices = @transform_11, window_bounds = array<i64: 1, 64, 128>}]} {
    %c0 = arith.constant 0 : index
    %c0_0 = arith.constant 0 : index
    %c0_1 = arith.constant 0 : index
    %0 = vector.load %arg2[%c0, %c0_0, %c0_1] : memref<1x64x128xf32, #tpu.memory_space<vmem>>, vector<1x64x128xf32>
    %1 = vector.shape_cast %0 : vector<1x64x128xf32> to vector<64x128xf32>
    %2 = arith.truncf %1 : vector<64x128xf32> to vector<64x128xbf16>
    %c0_2 = arith.constant 0 : index
    %c0_3 = arith.constant 0 : index
    %3 = vector.load %arg3[%c0_2, %c0_3] : memref<64x128xf32, #tpu.memory_space<vmem>>, vector<64x128xf32>
    %c0_4 = arith.constant 0 : index
    %c0_5 = arith.constant 0 : index
    %4 = vector.load %arg4[%c0_4, %c0_5] : memref<64x128xf32, #tpu.memory_space<vmem>>, vector<64x128xf32>
    %c0_6 = arith.constant 0 : index
    %c0_7 = arith.constant 0 : index
    %5 = vector.load %arg5[%c0_6, %c0_7] : memref<128x128xbf16, #tpu.memory_space<vmem>>, vector<128x128xbf16>
    %cst = arith.constant dense<0.000000e+00> : vector<64x128xf32>
    %6 = tpu.matmul %2, %5, %cst {dimension_numbers = #tpu.dot_dimension_numbers<[1], [0], [0], [1], [0, 0, 1, 1], [], []>} : vector<64x128xbf16>, vector<128x128xbf16>, vector<64x128xf32> -> vector<64x128xf32>
    %c0_8 = arith.constant 0 : index
    %c0_9 = arith.constant 0 : index
    %7 = vector.load %arg6[%c0_8, %c0_9] : memref<1x128xf32, #tpu.memory_space<vmem>>, vector<1x128xf32>
    %8 = vector.broadcast %7 : vector<1x128xf32> to vector<64x128xf32>
    %9 = arith.addf %6, %8 : vector<64x128xf32>
    %10 = arith.mulf %9, %3 : vector<64x128xf32>
    %c64_i32 = arith.constant 64 : i32
    %11 = tpu.dynamic_rotate %9 by %c64_i32 dim 1 : vector<64x128xf32>, i32 -> vector<64x128xf32>
    %12 = arith.mulf %11, %4 : vector<64x128xf32>
    %13 = arith.addf %10, %12 : vector<64x128xf32>
    %cst_10 = arith.constant 0.176776692 : f32
    %14 = vector.broadcast %cst_10 : f32 to vector<64x128xf32>
    %15 = arith.mulf %13, %14 : vector<64x128xf32>
    %16 = arith.truncf %15 : vector<64x128xf32> to vector<64x128xbf16>
    %c0_11 = arith.constant 0 : index
    %c0_12 = arith.constant 0 : index
    %c0_13 = arith.constant 0 : index
    %17 = vector.load %arg11[%c0_11, %c0_12, %c0_13] : memref<1x64x128xbf16, #tpu.memory_space<vmem>>, vector<1x64x128xbf16>
    %18 = vector.shape_cast %17 : vector<1x64x128xbf16> to vector<64x128xbf16>
    %19 = vector.shape_cast %16 : vector<64x128xbf16> to vector<1x64x128xbf16>
    tpu.vector_store %arg11[%c0_11, %c0_12, %c0_13], %19 {strides = array<i32>} : memref<1x64x128xbf16, #tpu.memory_space<vmem>>, vector<1x64x128xbf16>,
    %c0_14 = arith.constant 0 : index
    %c0_15 = arith.constant 0 : index
    %20 = vector.load %arg7[%c0_14, %c0_15] : memref<128x128xbf16, #tpu.memory_space<vmem>>, vector<128x128xbf16>
    %cst_16 = arith.constant dense<0.000000e+00> : vector<64x128xf32>
    %21 = tpu.matmul %2, %20, %cst_16 {dimension_numbers = #tpu.dot_dimension_numbers<[1], [0], [0], [1], [0, 0, 1, 1], [], []>} : vector<64x128xbf16>, vector<128x128xbf16>, vector<64x128xf32> -> vector<64x128xf32>
    %c0_17 = arith.constant 0 : index
    %c0_18 = arith.constant 0 : index
    %22 = vector.load %arg8[%c0_17, %c0_18] : memref<1x128xf32, #tpu.memory_space<vmem>>, vector<1x128xf32>
    %23 = vector.broadcast %22 : vector<1x128xf32> to vector<64x128xf32>
    %24 = arith.addf %21, %23 : vector<64x128xf32>
    %25 = arith.mulf %24, %3 : vector<64x128xf32>
    %c64_i32_19 = arith.constant 64 : i32
    %26 = tpu.dynamic_rotate %24 by %c64_i32_19 dim 1 : vector<64x128xf32>, i32 -> vector<64x128xf32>
    %27 = arith.mulf %26, %4 : vector<64x128xf32>
    %28 = arith.addf %25, %27 : vector<64x128xf32>
    %29 = arith.truncf %28 : vector<64x128xf32> to vector<64x128xbf16>
    %c0_20 = arith.constant 0 : index
    %c0_21 = arith.constant 0 : index
    %c0_22 = arith.constant 0 : index
    %30 = vector.load %arg12[%c0_20, %c0_21, %c0_22] : memref<1x64x128xbf16, #tpu.memory_space<vmem>>, vector<1x64x128xbf16>
    %31 = vector.shape_cast %30 : vector<1x64x128xbf16> to vector<64x128xbf16>
    %32 = vector.shape_cast %29 : vector<64x128xbf16> to vector<1x64x128xbf16>
    tpu.vector_store %arg12[%c0_20, %c0_21, %c0_22], %32 {strides = array<i32>} : memref<1x64x128xbf16, #tpu.memory_space<vmem>>, vector<1x64x128xbf16>,
    %c0_23 = arith.constant 0 : index
    %c0_24 = arith.constant 0 : index
    %33 = vector.load %arg9[%c0_23, %c0_24] : memref<128x128xbf16, #tpu.memory_space<vmem>>, vector<128x128xbf16>
    %cst_25 = arith.constant dense<0.000000e+00> : vector<64x128xf32>
    %34 = tpu.matmul %2, %33, %cst_25 {dimension_numbers = #tpu.dot_dimension_numbers<[1], [0], [0], [1], [0, 0, 1, 1], [], []>} : vector<64x128xbf16>, vector<128x128xbf16>, vector<64x128xf32> -> vector<64x128xf32>
    %c0_26 = arith.constant 0 : index
    %c0_27 = arith.constant 0 : index
    %35 = vector.load %arg10[%c0_26, %c0_27] : memref<1x128xf32, #tpu.memory_space<vmem>>, vector<1x128xf32>
    %36 = vector.broadcast %35 : vector<1x128xf32> to vector<64x128xf32>
    %37 = arith.addf %34, %36 : vector<64x128xf32>
    %38 = arith.truncf %37 : vector<64x128xf32> to vector<64x128xbf16>
    %c0_28 = arith.constant 0 : index
    %c0_29 = arith.constant 0 : index
    %c0_30 = arith.constant 0 : index
    %39 = vector.load %arg13[%c0_28, %c0_29, %c0_30] : memref<1x64x128xbf16, #tpu.memory_space<vmem>>, vector<1x64x128xbf16>
    %40 = vector.shape_cast %39 : vector<1x64x128xbf16> to vector<64x128xbf16>
    %41 = vector.shape_cast %38 : vector<64x128xbf16> to vector<1x64x128xbf16>
    tpu.vector_store %arg13[%c0_28, %c0_29, %c0_30], %41 {strides = array<i32>} : memref<1x64x128xbf16, #tpu.memory_space<vmem>>, vector<1x64x128xbf16>,
    return
  }
  func.func @transform_0(%arg0: i32, %arg1: i32) -> (i32, i32, i32) {
    %c0_i32 = arith.constant 0 : i32
    %c0_i32_0 = arith.constant 0 : i32
    return %arg0, %arg1, %c0_i32 : i32, i32, i32
  }
  func.func @transform_1(%arg0: i32, %arg1: i32) -> (i32, i32) {
    %c0_i32 = arith.constant 0 : i32
    %c0_i32_0 = arith.constant 0 : i32
    return %arg1, %c0_i32 : i32, i32
  }
  func.func @transform_2(%arg0: i32, %arg1: i32) -> (i32, i32) {
    %c0_i32 = arith.constant 0 : i32
    %c0_i32_0 = arith.constant 0 : i32
    return %arg1, %c0_i32 : i32, i32
  }
  func.func @transform_3(%arg0: i32, %arg1: i32) -> (i32, i32) {
    %c0_i32 = arith.constant 0 : i32
    %c0_i32_0 = arith.constant 0 : i32
    %c0_i32_1 = arith.constant 0 : i32
    return %c0_i32, %c0_i32_0 : i32, i32
  }
  func.func @transform_4(%arg0: i32, %arg1: i32) -> (i32, i32) {
    %c0_i32 = arith.constant 0 : i32
    %c0_i32_0 = arith.constant 0 : i32
    %c0_i32_1 = arith.constant 0 : i32
    return %c0_i32, %c0_i32_0 : i32, i32
  }
  func.func @transform_5(%arg0: i32, %arg1: i32) -> (i32, i32) {
    %c0_i32 = arith.constant 0 : i32
    %c0_i32_0 = arith.constant 0 : i32
    %c0_i32_1 = arith.constant 0 : i32
    return %c0_i32, %c0_i32_0 : i32, i32
  }
  func.func @transform_6(%arg0: i32, %arg1: i32) -> (i32, i32) {
    %c0_i32 = arith.constant 0 : i32
    %c0_i32_0 = arith.constant 0 : i32
    %c0_i32_1 = arith.constant 0 : i32
    return %c0_i32, %c0_i32_0 : i32, i32
  }
  func.func @transform_7(%arg0: i32, %arg1: i32) -> (i32, i32) {
    %c0_i32 = arith.constant 0 : i32
    %c0_i32_0 = arith.constant 0 : i32
    %c0_i32_1 = arith.constant 0 : i32
    return %c0_i32, %c0_i32_0 : i32, i32
  }
  func.func @transform_8(%arg0: i32, %arg1: i32) -> (i32, i32) {
    %c0_i32 = arith.constant 0 : i32
    %c0_i32_0 = arith.constant 0 : i32
    %c0_i32_1 = arith.constant 0 : i32
    return %c0_i32, %c0_i32_0 : i32, i32
  }
  func.func @transform_9(%arg0: i32, %arg1: i32) -> (i32, i32, i32) {
    %c0_i32 = arith.constant 0 : i32
    %c0_i32_0 = arith.constant 0 : i32
    return %arg0, %arg1, %c0_i32 : i32, i32, i32
  }
  func.func @transform_10(%arg0: i32, %arg1: i32) -> (i32, i32, i32) {
    %c0_i32 = arith.constant 0 : i32
    %c0_i32_0 = arith.constant 0 : i32
    return %arg0, %arg1, %c0_i32 : i32, i32, i32
  }
  func.func @transform_11(%arg0: i32, %arg1: i32) -> (i32, i32, i32) {
    %c0_i32 = arith.constant 0 : i32
    %c0_i32_0 = arith.constant 0 : i32
    return %arg0, %arg1, %c0_i32 : i32, i32, i32
  }
}

</mosaic_0001>

<llo_original>
// kernel: tpu_custom_call.1
$region0: #{tpu_custom_call.1}
  #allocation0 [shape = 'u32[]', space=smem, size = 0x4, offset = 0x4, fixed_abs, tag = 'smem constant byte address 0x4 - core index']
  #allocation1 [shape = 'u32[144,128]{1,0:T(1,128)}', space=vmem, size = 0x12000, scoped, tag = 'internal scratch']
  %s0 = inlined_call_operand.hbm [shape: f32[2,128,128], index: 0, kind: input, shape index: {}]
  %s1 = inlined_call_operand.hbm [shape: f32[128,128], index: 1, kind: input, shape index: {}]
  %s2 = inlined_call_operand.hbm [shape: f32[128,128], index: 2, kind: input, shape index: {}]
  %s3 = inlined_call_operand.hbm [shape: bf16[128,128], index: 3, kind: input, shape index: {}]
  %s4 = inlined_call_operand.vmem [shape: f32[1,128], index: 4, kind: input, shape index: {}]
  %s5 = inlined_call_operand.hbm [shape: bf16[128,128], index: 5, kind: input, shape index: {}]
  %s6 = inlined_call_operand.vmem [shape: f32[1,128], index: 6, kind: input, shape index: {}]
  %s7 = inlined_call_operand.hbm [shape: bf16[128,128], index: 7, kind: input, shape index: {}]
  %s8 = inlined_call_operand.vmem [shape: f32[1,128], index: 8, kind: input, shape index: {}]
  %s9 = inlined_call_operand.hbm [shape: bf16[2,128,128], index: 9, kind: output, shape index: {0}]
  %s10 = inlined_call_operand.hbm [shape: bf16[2,128,128], index: 10, kind: output, shape index: {1}]
  %s11 = inlined_call_operand.hbm [shape: bf16[2,128,128], index: 11, kind: output, shape index: {2}]
  %12 = xla_tuple %s9, %s10, %s11
  %s13 = sld [smem:[#allocation0]]
  $region109: #{tpu_custom_call.1} parent=0
    _
  %s15 = ssub.s32 1, %s13
  %s16 = scalar_select 0, %s15, %s13
  $region1: #{tpu_custom_call.1} parent=0
    #allocation2 [shape = 'u8[65536]{0}', space=vmem, size = 0x10000, scoped, tag = 'input window, operand 0']
    #allocation3 [shape = 's32[2]{0}', space=sflag, size = 0x8, scoped, tag = 'scoped memory for tpu_custom_call.1']
    #allocation4 [shape = 's32[2]{0}', space=sflag, size = 0x8, scoped, tag = 'scoped memory for tpu_custom_call.1']
    #allocation5 [shape = 'u8[65536]{0}', space=vmem, size = 0x10000, scoped, tag = 'input window, operand 1']
    #allocation6 [shape = 's32[2]{0}', space=sflag, size = 0x8, scoped, tag = 'scoped memory for tpu_custom_call.1']
    #allocation7 [shape = 'u8[65536]{0}', space=vmem, size = 0x10000, scoped, tag = 'input window, operand 2']
    #allocation8 [shape = 'u8[32768]{0}', space=vmem, size = 0x8000, scoped, tag = 'input window, operand 3, single buffered']
    #allocation9 [shape = 's32[1]{0}', space=sflag, size = 0x4, scoped, tag = 'scoped memory for tpu_custom_call.1']
    #allocation10 [shape = 'u8[32768]{0}', space=vmem, size = 0x8000, scoped, tag = 'input window, operand 5, single buffered']
    #allocation11 [shape = 'u8[32768]{0}', space=vmem, size = 0x8000, scoped, tag = 'input window, operand 7, single buffered']
    #allocation12 [shape = 's32[1]{0}', space=sflag, size = 0x4, scoped, tag = 'scoped memory for tpu_custom_call.1']
    #allocation13 [shape = 'u8[32768]{0}', space=vmem, size = 0x8000, scoped, tag = 'output window, operand 0']
    #allocation14 [shape = 'u8[32768]{0}', space=vmem, size = 0x8000, scoped, tag = 'output window, operand 1']
    #allocation15 [shape = 's32[2]{0}', space=sflag, size = 0x8, scoped, tag = 'scoped memory for tpu_custom_call.1']
    #allocation16 [shape = 'u8[32768]{0}', space=vmem, size = 0x8000, scoped, tag = 'output window, operand 2']
    %17 = vsyncpa [#allocation3], 0
    %s18 = scalar_lea.sflag [#allocation3], 1
    %19 = vsyncpa %s18, 0
    %20 = vsyncpa [#allocation6], 0
    %s21 = scalar_lea.sflag [#allocation6], 1
    %22 = vsyncpa %s21, 0
    %23 = vsyncpa [#allocation9], 0
    %24 = vsyncpa [#allocation12], 0
    %25 = vsyncpa [#allocation4], 0
    %s26 = scalar_lea.sflag [#allocation4], 1
    %27 = vsyncpa %s26, 0
    %28 = vsyncpa [#allocation15], 0
    %s29 = scalar_lea.sflag [#allocation15], 1
    %30 = vsyncpa %s29, 0
    loop: start=0, step=1, limit=6
    $region2: #{tpu_custom_call.1} parent=1 // loop_pre_header
      _
    $region3: #{tpu_custom_call.1} parent=1 // loop_header
      %s32 = sphi 0, %s36
      %p33 = scmp.ge.s32.totalorder %s32, 6
      %s39 = sphi 0, %s51
      %s40 = sphi 0, %s47
      %s41 = sphi 0, %s39
      %s42 = sphi 0, %s40
      %s43 = sphi 0, %s41
      %s44 = sphi 0, %s42
      %s56 = sphi 0, %s58
      %s59 = sphi 0, %s56
      %s60 = sphi 0, %s59
      %s76 = sphi 0, %s60
      %s82 = sphi 0, %s84
      %s85 = sphi 0, %s82
      %s86 = sphi 0, %s85
      %s102 = sphi 0, %s86
      %s108 = sphi 0, %s110
      %s111 = sphi 0, %s108
      %s112 = sphi 0, %s111
      %s128 = sphi 0, %s112
      %s132 = sphi 0, %s132
      %s134 = sphi 0, %s132
      %s135 = sphi 0, %s134
      %s149 = sphi 0, %s135
      %s153 = sphi 0, %s153
      %s155 = sphi 0, %s153
      %s156 = sphi 0, %s155
      %s170 = sphi 0, %s156
      %s174 = sphi 0, %s174
      %s176 = sphi 0, %s174
      %s177 = sphi 0, %s176
      %s191 = sphi 0, %s177
      %s195 = sphi 0, %s195
      %s197 = sphi 0, %s195
      %s198 = sphi 0, %s197
      %s212 = sphi 0, %s198
      %s216 = sphi 0, %s216
      %s218 = sphi 0, %s216
      %s219 = sphi 0, %s218
      %s233 = sphi 0, %s219
      %s237 = sphi 0, %s237
      %s239 = sphi 0, %s237
      %s240 = sphi 0, %s239
      %s254 = sphi 0, %s240
      %s262 = sphi 0, %s264
      %s265 = sphi 0, %s262
      %s266 = sphi 0, %s265
      %s282 = sphi 0, %s266
      %s290 = sphi 0, %s292
      %s293 = sphi 0, %s290
      %s294 = sphi 0, %s293
      %s310 = sphi 0, %s294
      %s318 = sphi 0, %s320
      %s321 = sphi 0, %s318
      %s322 = sphi 0, %s321
      %s338 = sphi 0, %s322
    $region4: #{tpu_custom_call.1} parent=1 // loop_header_branch
      %35 = sbr.rel (%p33) target = $region8
    $region5: #{tpu_custom_call.1} parent=1 // loop_body
      %s37 = ssub.s32 %s32, 1
      %s38 = ssub.s32 %s32, 2
      %s45 = sadd.s32 1, %s40
      %p46 = scmp.ge.s32.totalorder %s45, 2
      %s47 = scalar_select %p46, 0, %s45
      %s48 = sadd.s32 1, %s39
      %s49 = scalar_select %p46, %s48, %s39
      %p50 = scmp.ge.s32.totalorder %s49, 2
      %s51 = scalar_select %p50, 0, %s49
      %s52 = ssub.s32 %s39, %s51
      %s53 = ssub.s32 %s40, %s47
      %s54 = sor.u32 %s52, %s53
      %p55 = scmp.eq.s32.totalorder %s54, 0
      %s57 = sadd.s32 %s56, 1
      %s58 = scalar_select %p55, %s56, %s57
      %p61 = pneg %p55
      %p62 = scmp.eq.s32.totalorder %s32, 3
      %p63 = por %p61, %p62
      %p64 = scmp.ne.s32.totalorder %s56, %s59
      %p65 = scmp.eq.s32.totalorder %s32, 0
      %p66 = por %p64, %p65
      %p67 = scmp.ne.s32.totalorder %s56, %s59
      %p68 = scmp.eq.s32.totalorder %s37, 3
      %p69 = por %p67, %p68
      %p70 = scmp.ne.s32.totalorder %s59, %s60
      %p71 = scmp.eq.s32.totalorder %s37, 0
      %p72 = por %p70, %p71
      %p73 = scmp.ne.s32.totalorder %s59, %s60
      %p74 = scmp.eq.s32.totalorder %s38, 3
      %p75 = por %p73, %p74
      %p77 = scmp.ne.s32.totalorder %s60, %s76
      %p78 = scmp.eq.s32.totalorder %s38, 0
      %p79 = por %p77, %p78
      %s80 = ssub.s32 %s40, %s47
      %p81 = scmp.eq.s32.totalorder %s80, 0
      %s83 = sadd.s32 %s82, 1
      %s84 = scalar_select %p81, %s82, %s83
      %p87 = pneg %p81
      %p88 = scmp.eq.s32.totalorder %s32, 3
      %p89 = por %p87, %p88
      %p90 = scmp.ne.s32.totalorder %s82, %s85
      %p91 = scmp.eq.s32.totalorder %s32, 0
      %p92 = por %p90, %p91
      %p93 = scmp.ne.s32.totalorder %s82, %s85
      %p94 = scmp.eq.s32.totalorder %s37, 3
      %p95 = por %p93, %p94
      %p96 = scmp.ne.s32.totalorder %s85, %s86
      %p97 = scmp.eq.s32.totalorder %s37, 0
      %p98 = por %p96, %p97
      %p99 = scmp.ne.s32.totalorder %s85, %s86
      %p100 = scmp.eq.s32.totalorder %s38, 3
      %p101 = por %p99, %p100
      %p103 = scmp.ne.s32.totalorder %s86, %s102
      %p104 = scmp.eq.s32.totalorder %s38, 0
      %p105 = por %p103, %p104
      %s106 = ssub.s32 %s40, %s47
      %p107 = scmp.eq.s32.totalorder %s106, 0
      %s109 = sadd.s32 %s108, 1
      %s110 = scalar_select %p107, %s108, %s109
      %p113 = pneg %p107
      %p114 = scmp.eq.s32.totalorder %s32, 3
      %p115 = por %p113, %p114
      %p116 = scmp.ne.s32.totalorder %s108, %s111
      %p117 = scmp.eq.s32.totalorder %s32, 0
      %p118 = por %p116, %p117
      %p119 = scmp.ne.s32.totalorder %s108, %s111
      %p120 = scmp.eq.s32.totalorder %s37, 3
      %p121 = por %p119, %p120
      %p122 = scmp.ne.s32.totalorder %s111, %s112
      %p123 = scmp.eq.s32.totalorder %s37, 0
      %p124 = por %p122, %p123
      %p125 = scmp.ne.s32.totalorder %s111, %s112
      %p126 = scmp.eq.s32.totalorder %s38, 3
      %p127 = por %p125, %p126
      %p129 = scmp.ne.s32.totalorder %s112, %s128
      %p130 = scmp.eq.s32.totalorder %s38, 0
      %p131 = por %p129, %p130
      %s133 = sadd.s32 %s132, 1
      %p136 = scmp.eq.s32.totalorder %s32, 3
      %p137 = scmp.ne.s32.totalorder %s132, %s134
      %p138 = scmp.eq.s32.totalorder %s32, 0
      %p139 = por %p137, %p138
      %p140 = scmp.ne.s32.totalorder %s132, %s134
      %p141 = scmp.eq.s32.totalorder %s37, 3
      %p142 = por %p140, %p141
      %p143 = scmp.ne.s32.totalorder %s134, %s135
      %p144 = scmp.eq.s32.totalorder %s37, 0
      %p145 = por %p143, %p144
      %p146 = scmp.ne.s32.totalorder %s134, %s135
      %p147 = scmp.eq.s32.totalorder %s38, 3
      %p148 = por %p146, %p147
      %p150 = scmp.ne.s32.totalorder %s135, %s149
      %p151 = scmp.eq.s32.totalorder %s38, 0
      %p152 = por %p150, %p151
      %s154 = sadd.s32 %s153, 1
      %p157 = scmp.eq.s32.totalorder %s32, 3
      %p158 = scmp.ne.s32.totalorder %s153, %s155
      %p159 = scmp.eq.s32.totalorder %s32, 0
      %p160 = por %p158, %p159
      %p161 = scmp.ne.s32.totalorder %s153, %s155
      %p162 = scmp.eq.s32.totalorder %s37, 3
      %p163 = por %p161, %p162
      %p164 = scmp.ne.s32.totalorder %s155, %s156
      %p165 = scmp.eq.s32.totalorder %s37, 0
      %p166 = por %p164, %p165
      %p167 = scmp.ne.s32.totalorder %s155, %s156
      %p168 = scmp.eq.s32.totalorder %s38, 3
      %p169 = por %p167, %p168
      %p171 = scmp.ne.s32.totalorder %s156, %s170
      %p172 = scmp.eq.s32.totalorder %s38, 0
      %p173 = por %p171, %p172
      %s175 = sadd.s32 %s174, 1
      %p178 = scmp.eq.s32.totalorder %s32, 3
      %p179 = scmp.ne.s32.totalorder %s174, %s176
      %p180 = scmp.eq.s32.totalorder %s32, 0
      %p181 = por %p179, %p180
      %p182 = scmp.ne.s32.totalorder %s174, %s176
      %p183 = scmp.eq.s32.totalorder %s37, 3
      %p184 = por %p182, %p183
      %p185 = scmp.ne.s32.totalorder %s176, %s177
      %p186 = scmp.eq.s32.totalorder %s37, 0
      %p187 = por %p185, %p186
      %p188 = scmp.ne.s32.totalorder %s176, %s177
      %p189 = scmp.eq.s32.totalorder %s38, 3
      %p190 = por %p188, %p189
      %p192 = scmp.ne.s32.totalorder %s177, %s191
      %p193 = scmp.eq.s32.totalorder %s38, 0
      %p194 = por %p192, %p193
      %s196 = sadd.s32 %s195, 1
      %p199 = scmp.eq.s32.totalorder %s32, 3
      %p200 = scmp.ne.s32.totalorder %s195, %s197
      %p201 = scmp.eq.s32.totalorder %s32, 0
      %p202 = por %p200, %p201
      %p203 = scmp.ne.s32.totalorder %s195, %s197
      %p204 = scmp.eq.s32.totalorder %s37, 3
      %p205 = por %p203, %p204
      %p206 = scmp.ne.s32.totalorder %s197, %s198
      %p207 = scmp.eq.s32.totalorder %s37, 0
      %p208 = por %p206, %p207
      %p209 = scmp.ne.s32.totalorder %s197, %s198
      %p210 = scmp.eq.s32.totalorder %s38, 3
      %p211 = por %p209, %p210
      %p213 = scmp.ne.s32.totalorder %s198, %s212
      %p214 = scmp.eq.s32.totalorder %s38, 0
      %p215 = por %p213, %p214
      %s217 = sadd.s32 %s216, 1
      %p220 = scmp.eq.s32.totalorder %s32, 3
      %p221 = scmp.ne.s32.totalorder %s216, %s218
      %p222 = scmp.eq.s32.totalorder %s32, 0
      %p223 = por %p221, %p222
      %p224 = scmp.ne.s32.totalorder %s216, %s218
      %p225 = scmp.eq.s32.totalorder %s37, 3
      %p226 = por %p224, %p225
      %p227 = scmp.ne.s32.totalorder %s218, %s219
      %p228 = scmp.eq.s32.totalorder %s37, 0
      %p229 = por %p227, %p228
      %p230 = scmp.ne.s32.totalorder %s218, %s219
      %p231 = scmp.eq.s32.totalorder %s38, 3
      %p232 = por %p230, %p231
      %p234 = scmp.ne.s32.totalorder %s219, %s233
      %p235 = scmp.eq.s32.totalorder %s38, 0
      %p236 = por %p234, %p235
      %s238 = sadd.s32 %s237, 1
      %p241 = scmp.eq.s32.totalorder %s32, 3
      %p242 = scmp.ne.s32.totalorder %s237, %s239
      %p243 = scmp.eq.s32.totalorder %s32, 0
      %p244 = por %p242, %p243
      %p245 = scmp.ne.s32.totalorder %s237, %s239
      %p246 = scmp.eq.s32.totalorder %s37, 3
      %p247 = por %p245, %p246
      %p248 = scmp.ne.s32.totalorder %s239, %s240
      %p249 = scmp.eq.s32.totalorder %s37, 0
      %p250 = por %p248, %p249
      %p251 = scmp.ne.s32.totalorder %s239, %s240
      %p252 = scmp.eq.s32.totalorder %s38, 3
      %p253 = por %p251, %p252
      %p255 = scmp.ne.s32.totalorder %s240, %s254
      %p256 = scmp.eq.s32.totalorder %s38, 0
      %p257 = por %p255, %p256
      %s258 = ssub.s32 %s39, %s51
      %s259 = ssub.s32 %s40, %s47
      %s260 = sor.u32 %s258, %s259
      %p261 = scmp.eq.s32.totalorder %s260, 0
      %s263 = sadd.s32 %s262, 1
      %s264 = scalar_select %p261, %s262, %s263
      %p267 = pneg %p261
      %p268 = scmp.eq.s32.totalorder %s32, 3
      %p269 = por %p267, %p268
      %p270 = scmp.ne.s32.totalorder %s262, %s265
      %p271 = scmp.eq.s32.totalorder %s32, 0
      %p272 = por %p270, %p271
      %p273 = scmp.ne.s32.totalorder %s262, %s265
      %p274 = scmp.eq.s32.totalorder %s37, 3
      %p275 = por %p273, %p274
      %p276 = scmp.ne.s32.totalorder %s265, %s266
      %p277 = scmp.eq.s32.totalorder %s37, 0
      %p278 = por %p276, %p277
      %p279 = scmp.ne.s32.totalorder %s265, %s266
      %p280 = scmp.eq.s32.totalorder %s38, 3
      %p281 = por %p279, %p280
      %p283 = scmp.ne.s32.totalorder %s266, %s282
      %p284 = scmp.eq.s32.totalorder %s38, 0
      %p285 = por %p283, %p284
      %s286 = ssub.s32 %s39, %s51
      %s287 = ssub.s32 %s40, %s47
      %s288 = sor.u32 %s286, %s287
      %p289 = scmp.eq.s32.totalorder %s288, 0
      %s291 = sadd.s32 %s290, 1
      %s292 = scalar_select %p289, %s290, %s291
      %p295 = pneg %p289
      %p296 = scmp.eq.s32.totalorder %s32, 3
      %p297 = por %p295, %p296
      %p298 = scmp.ne.s32.totalorder %s290, %s293
      %p299 = scmp.eq.s32.totalorder %s32, 0
      %p300 = por %p298, %p299
      %p301 = scmp.ne.s32.totalorder %s290, %s293
      %p302 = scmp.eq.s32.totalorder %s37, 3
      %p303 = por %p301, %p302
      %p304 = scmp.ne.s32.totalorder %s293, %s294
      %p305 = scmp.eq.s32.totalorder %s37, 0
      %p306 = por %p304, %p305
      %p307 = scmp.ne.s32.totalorder %s293, %s294
      %p308 = scmp.eq.s32.totalorder %s38, 3
      %p309 = por %p307, %p308
      %p311 = scmp.ne.s32.totalorder %s294, %s310
      %p312 = scmp.eq.s32.totalorder %s38, 0
      %p313 = por %p311, %p312
      %s314 = ssub.s32 %s39, %s51
      %s315 = ssub.s32 %s40, %s47
      %s316 = sor.u32 %s314, %s315
      %p317 = scmp.eq.s32.totalorder %s316, 0
      %s319 = sadd.s32 %s318, 1
      %s320 = scalar_select %p317, %s318, %s319
      %p323 = pneg %p317
      %p324 = scmp.eq.s32.totalorder %s32, 3
      %p325 = por %p323, %p324
      %p326 = scmp.ne.s32.totalorder %s318, %s321
      %p327 = scmp.eq.s32.totalorder %s32, 0
      %p328 = por %p326, %p327
      %p329 = scmp.ne.s32.totalorder %s318, %s321
      %p330 = scmp.eq.s32.totalorder %s37, 3
      %p331 = por %p329, %p330
      %p332 = scmp.ne.s32.totalorder %s321, %s322
      %p333 = scmp.eq.s32.totalorder %s37, 0
      %p334 = por %p332, %p333
      %p335 = scmp.ne.s32.totalorder %s321, %s322
      %p336 = scmp.eq.s32.totalorder %s38, 3
      %p337 = por %p335, %p336
      %p339 = scmp.ne.s32.totalorder %s322, %s338
      %p340 = scmp.eq.s32.totalorder %s38, 0
      %p341 = por %p339, %p340
      %p342 = scmp.le.s32.totalorder 1, %s32
      %p343 = scmp.lt.s32.totalorder %s32, 5
      %p344 = pnand %p342, %p343
      %p345 = pneg %p344
      // Predicated region
      $region9: #{tpu_custom_call.1} parent=5 // pred_check
        _
      $region10: #{tpu_custom_call.1} parent=5 // pred_check_branch
        %347 = sbr.rel (%p344) target = $region12
      $region11: #{tpu_custom_call.1} parent=5 // pred_region
        %s348 = ssub.s32 %s32, 1
        // Predicated region
        $region13: #{tpu_custom_call.1} parent=11 // pred_check
          %p349 = pneg %p145
        $region14: #{tpu_custom_call.1} parent=11 // pred_check_branch
          %351 = sbr.rel (%p349) target = $region16
        $region15: #{tpu_custom_call.1} parent=11 // pred_region
          %s353 = ssub.s32 1024, 1024
          %354 = vsyncadd [#allocation9], %s353
          %s355 = sshll.u32 [#allocation8], 4
          %s356 = int_to_ptr.vmem [resolvable:$true] %s355
          %361 = dma.hbm_to_vmem [thread:$0]  %s3, 1024, %s356, [#allocation9], 64, 64, 4
        $region16: #{tpu_custom_call.1} parent=11 // pred_fallthru
          _
        // Predicated region
        $region17: #{tpu_custom_call.1} parent=11 // pred_check
          %p362 = pneg %p166
        $region18: #{tpu_custom_call.1} parent=11 // pred_check_branch
          %364 = sbr.rel (%p362) target = $region20
        $region19: #{tpu_custom_call.1} parent=11 // pred_region
          _
        $region20: #{tpu_custom_call.1} parent=11 // pred_fallthru
          _
        // Predicated region
        $region21: #{tpu_custom_call.1} parent=11 // pred_check
          %p365 = pneg %p187
        $region22: #{tpu_custom_call.1} parent=11 // pred_check_branch
          %367 = sbr.rel (%p365) target = $region24
        $region23: #{tpu_custom_call.1} parent=11 // pred_region
          %s369 = ssub.s32 1024, 1024
          %370 = vsyncadd [#allocation9], %s369
          %s371 = sshll.u32 [#allocation10], 4
          %s372 = int_to_ptr.vmem [resolvable:$true] %s371
          %377 = dma.hbm_to_vmem [thread:$0]  %s5, 1024, %s372, [#allocation9], 64, 64, 4
        $region24: #{tpu_custom_call.1} parent=11 // pred_fallthru
          _
        // Predicated region
        $region25: #{tpu_custom_call.1} parent=11 // pred_check
          %p378 = pneg %p208
        $region26: #{tpu_custom_call.1} parent=11 // pred_check_branch
          %380 = sbr.rel (%p378) target = $region28
        $region27: #{tpu_custom_call.1} parent=11 // pred_region
          _
        $region28: #{tpu_custom_call.1} parent=11 // pred_fallthru
          _
        // Predicated region
        $region29: #{tpu_custom_call.1} parent=11 // pred_check
          %p381 = pneg %p229
        $region30: #{tpu_custom_call.1} parent=11 // pred_check_branch
          %383 = sbr.rel (%p381) target = $region32
        $region31: #{tpu_custom_call.1} parent=11 // pred_region
          %s385 = ssub.s32 1024, 1024
          %386 = vsyncadd [#allocation12], %s385
          %s387 = sshll.u32 [#allocation11], 4
          %s388 = int_to_ptr.vmem [resolvable:$true] %s387
          %393 = dma.hbm_to_vmem [thread:$0]  %s7, 1024, %s388, [#allocation12], 64, 64, 4
        $region32: #{tpu_custom_call.1} parent=11 // pred_fallthru
          _
        // Predicated region
        $region33: #{tpu_custom_call.1} parent=11 // pred_check
          %p394 = pneg %p250
        $region34: #{tpu_custom_call.1} parent=11 // pred_check_branch
          %396 = sbr.rel (%p394) target = $region36
        $region35: #{tpu_custom_call.1} parent=11 // pred_region
          _
        $region36: #{tpu_custom_call.1} parent=11 // pred_fallthru
          _
      $region12: #{tpu_custom_call.1} parent=5 // pred_fallthru
        _
      %p397 = scmp.lt.s32.totalorder %s32, 4
      // Predicated region
      $region37: #{tpu_custom_call.1} parent=5 // pred_check
        %p398 = pneg %p397
      $region38: #{tpu_custom_call.1} parent=5 // pred_check_branch
        %400 = sbr.rel (%p398) target = $region40
      $region39: #{tpu_custom_call.1} parent=5 // pred_region
        // Predicated region
        $region41: #{tpu_custom_call.1} parent=39 // pred_check
          %p401 = pneg %p66
        $region42: #{tpu_custom_call.1} parent=39 // pred_check_branch
          %403 = sbr.rel (%p401) target = $region44
        $region43: #{tpu_custom_call.1} parent=39 // pred_region
          %s404 = sand.u32 %s56, 1
          %s405 = scalar_lea.sflag [#allocation3], %s404
          %s406 = sand.u32 %s56, 1
          %s407 = smul.addr %s406, 64
          %s408 = scalar_lea.vmem [#allocation2], %s407
          %s409 = smul.u32 8, %s40
          %s411 = ssub.s32 1024, 1024
          %412 = vsyncadd %s405, %s411
          %s413 = smul.addr %s39, 16
          %s414 = sadd.s32 %s409, %s413
          %s415 = smul.addr %s414, 128
          %s416 = scalar_lea.hbm %s0, %s415
          %s417 = sshll.u32 %s408, 4
          %s418 = int_to_ptr.vmem [resolvable:$true] %s417
          %423 = dma.hbm_to_vmem [thread:$0]  %s416, 1024, %s418, %s405, 128, 128, 8
        $region44: #{tpu_custom_call.1} parent=39 // pred_fallthru
          _
        // Predicated region
        $region45: #{tpu_custom_call.1} parent=39 // pred_check
          %p424 = pneg %p92
        $region46: #{tpu_custom_call.1} parent=39 // pred_check_branch
          %426 = sbr.rel (%p424) target = $region48
        $region47: #{tpu_custom_call.1} parent=39 // pred_region
          %s427 = sand.u32 %s32, 1
          %s428 = scalar_lea.sflag [#allocation6], %s427
          %s429 = sand.u32 %s82, 1
          %s430 = smul.addr %s429, 64
          %s431 = scalar_lea.vmem [#allocation5], %s430
          %s432 = smul.u32 8, %s40
          %s434 = ssub.s32 1024, 1024
          %435 = vsyncadd %s428, %s434
          %s436 = smul.addr %s432, 128
          %s437 = scalar_lea.hbm %s1, %s436
          %s438 = sshll.u32 %s431, 4
          %s439 = int_to_ptr.vmem [resolvable:$true] %s438
          %444 = dma.hbm_to_vmem [thread:$0]  %s437, 1024, %s439, %s428, 128, 128, 8
        $region48: #{tpu_custom_call.1} parent=39 // pred_fallthru
          _
        // Predicated region
        $region49: #{tpu_custom_call.1} parent=39 // pred_check
          %p445 = pneg %p118
        $region50: #{tpu_custom_call.1} parent=39 // pred_check_branch
          %447 = sbr.rel (%p445) target = $region52
        $region51: #{tpu_custom_call.1} parent=39 // pred_region
          %s448 = sand.u32 %s32, 1
          %s449 = scalar_lea.sflag [#allocation6], %s448
          %s450 = sand.u32 %s108, 1
          %s451 = smul.addr %s450, 64
          %s452 = scalar_lea.vmem [#allocation7], %s451
          %s453 = smul.u32 8, %s40
          %s455 = ssub.s32 1024, 1024
          %456 = vsyncadd %s449, %s455
          %s457 = smul.addr %s453, 128
          %s458 = scalar_lea.hbm %s2, %s457
          %s459 = sshll.u32 %s452, 4
          %s460 = int_to_ptr.vmem [resolvable:$true] %s459
          %465 = dma.hbm_to_vmem [thread:$0]  %s458, 1024, %s460, %s449, 128, 128, 8
        $region52: #{tpu_custom_call.1} parent=39 // pred_fallthru
          _
      $region40: #{tpu_custom_call.1} parent=5 // pred_fallthru
        _
      %p466 = scmp.le.s32.totalorder 1, %s32
      %p467 = scmp.lt.s32.totalorder %s32, 5
      %p468 = pnand %p466, %p467
      %p469 = pneg %p468
      // Predicated region
      $region53: #{tpu_custom_call.1} parent=5 // pred_check
        _
      $region54: #{tpu_custom_call.1} parent=5 // pred_check_branch
        %471 = sbr.rel (%p468) target = $region56
      $region55: #{tpu_custom_call.1} parent=5 // pred_region
        %s472 = ssub.s32 %s32, 1
        %s473 = sand.u32 %s59, 1
        %s474 = scalar_lea.sflag [#allocation3], %s473
        %s475 = sand.u32 %s59, 1
        %s476 = smul.addr %s475, 64
        %s477 = scalar_lea.vmem [#allocation2], %s476
        // Predicated region
        $region57: #{tpu_custom_call.1} parent=55 // pred_check
          %p478 = pneg %p72
        $region58: #{tpu_custom_call.1} parent=55 // pred_check_branch
          %480 = sbr.rel (%p478) target = $region60
        $region59: #{tpu_custom_call.1} parent=55 // pred_region
          %481 = dma.done %s474, 1024
        $region60: #{tpu_custom_call.1} parent=55 // pred_fallthru
          _
        %s482 = sand.u32 %s37, 1
        %s483 = scalar_lea.sflag [#allocation6], %s482
        %s484 = sand.u32 %s85, 1
        %s485 = smul.addr %s484, 64
        %s486 = scalar_lea.vmem [#allocation5], %s485
        // Predicated region
        $region61: #{tpu_custom_call.1} parent=55 // pred_check
          %p487 = pneg %p98
        $region62: #{tpu_custom_call.1} parent=55 // pred_check_branch
          %489 = sbr.rel (%p487) target = $region64
        $region63: #{tpu_custom_call.1} parent=55 // pred_region
          %490 = dma.done %s483, 1024
        $region64: #{tpu_custom_call.1} parent=55 // pred_fallthru
          _
        %s491 = sand.u32 %s37, 1
        %s492 = scalar_lea.sflag [#allocation6], %s491
        %s493 = sand.u32 %s111, 1
        %s494 = smul.addr %s493, 64
        %s495 = scalar_lea.vmem [#allocation7], %s494
        // Predicated region
        $region65: #{tpu_custom_call.1} parent=55 // pred_check
          %p496 = pneg %p124
        $region66: #{tpu_custom_call.1} parent=55 // pred_check_branch
          %498 = sbr.rel (%p496) target = $region68
        $region67: #{tpu_custom_call.1} parent=55 // pred_region
          %499 = dma.done %s492, 1024
        $region68: #{tpu_custom_call.1} parent=55 // pred_fallthru
          _
        // Predicated region
        $region69: #{tpu_custom_call.1} parent=55 // pred_check
          %p500 = pneg %p145
        $region70: #{tpu_custom_call.1} parent=55 // pred_check_branch
          %502 = sbr.rel (%p500) target = $region72
        $region71: #{tpu_custom_call.1} parent=55 // pred_region
          %503 = dma.done [#allocation9], 1024
        $region72: #{tpu_custom_call.1} parent=55 // pred_fallthru
          _
        // Predicated region
        $region73: #{tpu_custom_call.1} parent=55 // pred_check
          %p504 = pneg %p187
        $region74: #{tpu_custom_call.1} parent=55 // pred_check_branch
          %506 = sbr.rel (%p504) target = $region76
        $region75: #{tpu_custom_call.1} parent=55 // pred_region
          %507 = dma.done [#allocation9], 1024
        $region76: #{tpu_custom_call.1} parent=55 // pred_fallthru
          _
        // Predicated region
        $region77: #{tpu_custom_call.1} parent=55 // pred_check
          %p508 = pneg %p229
        $region78: #{tpu_custom_call.1} parent=55 // pred_check_branch
          %510 = sbr.rel (%p508) target = $region80
        $region79: #{tpu_custom_call.1} parent=55 // pred_region
          %511 = dma.done [#allocation12], 1024
        $region80: #{tpu_custom_call.1} parent=55 // pred_fallthru
          _
        %s512 = sand.u32 %s59, 1
        %s513 = scalar_lea.sflag [#allocation3], %s512
        %s514 = sand.u32 %s59, 1
        %s515 = smul.addr %s514, 64
        %s516 = scalar_lea.vmem [#allocation2], %s515
        %p517 = pneg %p72
        %p518 = pneg %p69
        %s519 = sand.u32 %s37, 1
        %s520 = scalar_lea.sflag [#allocation6], %s519
        %s521 = sand.u32 %s85, 1
        %s522 = smul.addr %s521, 64
        %s523 = scalar_lea.vmem [#allocation5], %s522
        %p524 = pneg %p98
        %p525 = pneg %p95
        %s526 = sand.u32 %s37, 1
        %s527 = scalar_lea.sflag [#allocation6], %s526
        %s528 = sand.u32 %s111, 1
        %s529 = smul.addr %s528, 64
        %s530 = scalar_lea.vmem [#allocation7], %s529
        %p531 = pneg %p124
        %p532 = pneg %p121
        %p533 = pneg %p145
        %p534 = pneg %p142
        %p535 = pneg %p166
        %p536 = pneg %p163
        %p537 = pneg %p187
        %p538 = pneg %p184
        %p539 = pneg %p208
        %p540 = pneg %p205
        %p541 = pneg %p229
        %p542 = pneg %p226
        %p543 = pneg %p250
        %p544 = pneg %p247
        %p545 = pneg %p278
        %p546 = pneg %p275
        %s547 = sand.u32 %s265, 1
        %s548 = scalar_lea.sflag [#allocation4], %s547
        %s549 = sand.u32 %s265, 1
        %s550 = smul.addr %s549, 32
        %s551 = scalar_lea.vmem [#allocation13], %s550
        %p552 = pneg %p306
        %p553 = pneg %p303
        %s554 = sand.u32 %s37, 1
        %s555 = scalar_lea.sflag [#allocation15], %s554
        %s556 = sand.u32 %s293, 1
        %s557 = smul.addr %s556, 32
        %s558 = scalar_lea.vmem [#allocation14], %s557
        %p559 = pneg %p334
        %p560 = pneg %p331
        %s561 = sand.u32 %s37, 1
        %s562 = scalar_lea.sflag [#allocation15], %s561
        %s563 = sand.u32 %s321, 1
        %s564 = smul.addr %s563, 32
        %s565 = scalar_lea.vmem [#allocation16], %s564
        %s566 = smul.u32 8, %s42
        %s567 = smul.u32 8, %s42
        %s568 = smul.u32 8, %s42
        %s569 = smul.u32 8, %s42
        %s570 = smul.u32 8, %s42
        %s571 = smul.u32 8, %s42
        %v573 = vld [vmem:[%s477] sm:$0xff]
        %v574 = vld [vmem:[%s477 + $0x8] sm:$0xff]
        %v575 = vld [vmem:[%s477 + $0x10] sm:$0xff]
        %v576 = vld [vmem:[%s477 + $0x18] sm:$0xff]
        %v577 = vld [vmem:[%s477 + $0x20] sm:$0xff]
        %v578 = vld [vmem:[%s477 + $0x28] sm:$0xff]
        %v579 = vld [vmem:[%s477 + $0x30] sm:$0xff]
        %v580 = vld [vmem:[%s477 + $0x38] sm:$0xff]
        %v581 = vpack.c.bf16 %v574, %v573
        %v582 = vpack.c.bf16 %v576, %v575
        %v583 = vpack.c.bf16 %v578, %v577
        %v584 = vpack.c.bf16 %v580, %v579
        %v585 = vld [vmem:[%s486] sm:$0xff]
        %v586 = vld [vmem:[%s486 + $0x8] sm:$0xff]
        %v587 = vld [vmem:[%s486 + $0x10] sm:$0xff]
        %v588 = vld [vmem:[%s486 + $0x18] sm:$0xff]
        %v589 = vld [vmem:[%s486 + $0x20] sm:$0xff]
        %v590 = vld [vmem:[%s486 + $0x28] sm:$0xff]
        %v591 = vld [vmem:[%s486 + $0x30] sm:$0xff]
        %v592 = vld [vmem:[%s486 + $0x38] sm:$0xff]
        %v593 = vld [vmem:[%s495] sm:$0xff]
        %v594 = vld [vmem:[%s495 + $0x8] sm:$0xff]
        %v595 = vld [vmem:[%s495 + $0x10] sm:$0xff]
        %v596 = vld [vmem:[%s495 + $0x18] sm:$0xff]
        %v597 = vld [vmem:[%s495 + $0x20] sm:$0xff]
        %v598 = vld [vmem:[%s495 + $0x28] sm:$0xff]
        %v599 = vld [vmem:[%s495 + $0x30] sm:$0xff]
        %v600 = vld [vmem:[%s495 + $0x38] sm:$0xff]
        %v601 = vld [vmem:[#allocation8] sm:$0xf]
        %v602 = vld [vmem:[#allocation8 + $0x4] sm:$0xf]
        %v603 = vld [vmem:[#allocation8 + $0x8] sm:$0xf]
        %v604 = vld [vmem:[#allocation8 + $0xc] sm:$0xf]
        %v605 = vld [vmem:[#allocation8 + $0x10] sm:$0xf]
        %v606 = vld [vmem:[#allocation8 + $0x14] sm:$0xf]
        %v607 = vld [vmem:[#allocation8 + $0x18] sm:$0xf]
        %v608 = vld [vmem:[#allocation8 + $0x1c] sm:$0xf]
        %v609 = vld [vmem:[#allocation8 + $0x20] sm:$0xf]
        %v610 = vld [vmem:[#allocation8 + $0x24] sm:$0xf]
        %v611 = vld [vmem:[#allocation8 + $0x28] sm:$0xf]
        %v612 = vld [vmem:[#allocation8 + $0x2c] sm:$0xf]
        %v613 = vld [vmem:[#allocation8 + $0x30] sm:$0xf]
        %v614 = vld [vmem:[#allocation8 + $0x34] sm:$0xf]
        %v615 = vld [vmem:[#allocation8 + $0x38] sm:$0xf]
        %v616 = vld [vmem:[#allocation8 + $0x3c] sm:$0xf]
        %v617 = vld [vmem:[%s4] sm:$0x1]
        %v619 = vlaneseq
        %v620 = vshrl.u32 %v619, 7
        %v621 = vsub.s32 0, %v620
        %v622 = vrot.slane %v617, %v621
        %v640 = vunpack.c.l.b16 %v601
        %v641 = vunpack.c.l.b16 %v602
        %v642 = vunpack.c.l.b16 %v603
        %v643 = vunpack.c.l.b16 %v604
        %v644 = vunpack.c.l.b16 %v605
        %v645 = vunpack.c.l.b16 %v606
        %v646 = vunpack.c.l.b16 %v607
        %v647 = vunpack.c.l.b16 %v608
        %v648 = vunpack.c.l.b16 %v609
        %v649 = vunpack.c.l.b16 %v610
        %v650 = vunpack.c.l.b16 %v611
        %v651 = vunpack.c.l.b16 %v612
        %v652 = vunpack.c.l.b16 %v613
        %v653 = vunpack.c.l.b16 %v614
        %v654 = vunpack.c.l.b16 %v615
        %v655 = vunpack.c.l.b16 %v616
        %v656 = vpack.c.b16 %v641, %v640
        %v657 = vpack.c.b16 %v643, %v642
        %v658 = vpack.c.b16 %v645, %v644
        %v659 = vpack.c.b16 %v647, %v646
        %v660 = vpack.c.b16 %v649, %v648
        %v661 = vpack.c.b16 %v651, %v650
        %v662 = vpack.c.b16 %v653, %v652
        %v663 = vpack.c.b16 %v655, %v654
        %672 = vmatprep.subr.bf16.mxu0 0
        %673 = vmatpush1.bf16.msra.mxu0 %v656
        %674 = vmatprep.subr.bf16.mxu0 0
        %675 = vmatpush1.bf16.msra.mxu0 %v657
        %676 = vmatprep.subr.bf16.mxu0 0
        %677 = vmatpush1.bf16.msra.mxu0 %v658
        %678 = vmatprep.subr.bf16.mxu0 0
        %679 = vmatpush1.bf16.msra.mxu0 %v659
        %680 = vmatprep.subr.bf16.mxu0 0
        %681 = vmatpush1.bf16.msra.mxu0 %v660
        %682 = vmatprep.subr.bf16.mxu0 0
        %683 = vmatpush1.bf16.msra.mxu0 %v661
        %684 = vmatprep.subr.bf16.mxu0 0
        %685 = vmatpush1.bf16.msra.mxu0 %v662
        %686 = vmatprep.subr.bf16.mxu0 0
        %687 = vmatpush1.bf16.msra.mxu0 %v663
        %688 = vmatprep.subr.bf16.mxu0 0
        %689 = vmatpush1.bf16.msra.mxu0 0
        %690 = vmatprep.subr.bf16.mxu0 0
        %691 = vmatpush1.bf16.msra.mxu0 0
        %692 = vmatprep.subr.bf16.mxu0 0
        %693 = vmatpush1.bf16.msra.mxu0 0
        %694 = vmatprep.subr.bf16.mxu0 0
        %695 = vmatpush1.bf16.msra.mxu0 0
        %696 = vmatprep.subr.bf16.mxu0 0
        %697 = vmatpush1.bf16.msra.mxu0 0
        %698 = vmatprep.subr.bf16.mxu0 0
        %699 = vmatpush1.bf16.msra.mxu0 0
        %700 = vmatprep.subr.bf16.mxu0 0
        %701 = vmatpush1.bf16.msra.mxu0 0
        %702 = vmatprep.subr.bf16.mxu0 0
        %703 = vmatpush1.bf16.msra.mxu0 0
        %704 = vmatprep.mubr.bf16.mxu0 0
        %705 = vmatmul.mubr.bf16.gmra.mrb[0].mxu0 %v581
        %v706 = vpop.f32.mrb[0].mxu0
        %v707 = vadd.f32 %v622, %v706
        %v708 = vpop.f32.mrb[0].mxu0
        %v709 = vpop.f32.mrb[0].mxu0
        %v710 = vadd.f32 %v622, %v709
        %v711 = vpop.f32.mrb[0].mxu0
        %712 = vmatprep.mubr.bf16.mxu0 0
        %713 = vmatmul.mubr.bf16.gmra.mrb[0].mxu0 %v582
        %v714 = vpop.f32.mrb[0].mxu0
        %v715 = vadd.f32 %v622, %v714
        %v716 = vpop.f32.mrb[0].mxu0
        %v717 = vpop.f32.mrb[0].mxu0
        %v718 = vadd.f32 %v622, %v717
        %v719 = vpop.f32.mrb[0].mxu0
        %720 = vmatprep.mubr.bf16.mxu0 0
        %721 = vmatmul.mubr.bf16.gmra.mrb[0].mxu0 %v583
        %v722 = vpop.f32.mrb[0].mxu0
        %v723 = vadd.f32 %v622, %v722
        %v724 = vpop.f32.mrb[0].mxu0
        %v725 = vpop.f32.mrb[0].mxu0
        %v726 = vadd.f32 %v622, %v725
        %v727 = vpop.f32.mrb[0].mxu0
        %728 = vmatprep.mubr.bf16.mxu0 0
        %729 = vmatmul.mubr.bf16.gmra.mrb[0].mxu0 %v584
        %v730 = vpop.f32.mrb[0].mxu0
        %v731 = vadd.f32 %v622, %v730
        %v732 = vpop.f32.mrb[0].mxu0
        %v733 = vpop.f32.mrb[0].mxu0
        %v734 = vadd.f32 %v622, %v733
        %v735 = vpop.f32.mrb[0].mxu0
        %736 = vdwg.mxu0
        %v737 = vmul.f32 %v707, %v585
        %v738 = vmul.f32 %v710, %v586
        %v739 = vmul.f32 %v715, %v587
        %v740 = vmul.f32 %v718, %v588
        %v741 = vmul.f32 %v723, %v589
        %v742 = vmul.f32 %v726, %v590
        %v743 = vmul.f32 %v731, %v591
        %v744 = vmul.f32 %v734, %v592
        %745 = vrot.lane.b32.xlu0 %v707, 64
        %v746 = vpop.permute.xlu0 %745
        %747 = vrot.lane.b32.xlu0 %v710, 64
        %v748 = vpop.permute.xlu0 %747
        %749 = vrot.lane.b32.xlu0 %v715, 64
        %v750 = vpop.permute.xlu0 %749
        %751 = vrot.lane.b32.xlu0 %v718, 64
        %v752 = vpop.permute.xlu0 %751
        %753 = vrot.lane.b32.xlu0 %v723, 64
        %v754 = vpop.permute.xlu0 %753
        %755 = vrot.lane.b32.xlu0 %v726, 64
        %v756 = vpop.permute.xlu0 %755
        %757 = vrot.lane.b32.xlu0 %v731, 64
        %v758 = vpop.permute.xlu0 %757
        %759 = vrot.lane.b32.xlu0 %v734, 64
        %v760 = vpop.permute.xlu0 %759
        %v761 = vmul.f32 %v746, %v593
        %v762 = vmul.f32 %v748, %v594
        %v763 = vmul.f32 %v750, %v595
        %v764 = vmul.f32 %v752, %v596
        %v765 = vmul.f32 %v754, %v597
        %v766 = vmul.f32 %v756, %v598
        %v767 = vmul.f32 %v758, %v599
        %v768 = vmul.f32 %v760, %v600
        %v769 = vadd.f32 %v737, %v761
        %v770 = vadd.f32 %v738, %v762
        %v771 = vadd.f32 %v739, %v763
        %v772 = vadd.f32 %v740, %v764
        %v773 = vadd.f32 %v741, %v765
        %v774 = vadd.f32 %v742, %v766
        %v775 = vadd.f32 %v743, %v767
        %v776 = vadd.f32 %v744, %v768
        %v777 = vmul.f32 %v769, 0.17677669
        %v778 = vmul.f32 %v770, 0.17677669
        %v779 = vmul.f32 %v771, 0.17677669
        %v780 = vmul.f32 %v772, 0.17677669
        %v781 = vmul.f32 %v773, 0.17677669
        %v782 = vmul.f32 %v774, 0.17677669
        %v783 = vmul.f32 %v775, 0.17677669
        %v784 = vmul.f32 %v776, 0.17677669
        %v785 = vpack.c.bf16 %v778, %v777
        %v786 = vpack.c.bf16 %v780, %v779
        %v787 = vpack.c.bf16 %v782, %v781
        %v788 = vpack.c.bf16 %v784, %v783
        %v793 = vunpack.c.l.b16 %v785
        %v794 = vunpack.c.h.b16 %v785
        %v795 = vunpack.c.l.b16 %v786
        %v796 = vunpack.c.h.b16 %v786
        %v797 = vunpack.c.l.b16 %v787
        %v798 = vunpack.c.h.b16 %v787
        %v799 = vunpack.c.l.b16 %v788
        %v800 = vunpack.c.h.b16 %v788
        %v801 = vpack.c.b16 %v793, %v793
        %v802 = vpack.c.b16 %v794, %v794
        %v803 = vpack.c.b16 %v795, %v795
        %v804 = vpack.c.b16 %v796, %v796
        %v805 = vpack.c.b16 %v797, %v797
        %v806 = vpack.c.b16 %v798, %v798
        %v807 = vpack.c.b16 %v799, %v799
        %v808 = vpack.c.b16 %v800, %v800
        %817 = vst [vmem:[%s551] sm:$0xf] %v801
        %818 = vst [vmem:[%s551 + $0x4] sm:$0xf] %v802
        %819 = vst [vmem:[%s551 + $0x8] sm:$0xf] %v803
        %820 = vst [vmem:[%s551 + $0xc] sm:$0xf] %v804
        %821 = vst [vmem:[%s551 + $0x10] sm:$0xf] %v805
        %822 = vst [vmem:[%s551 + $0x14] sm:$0xf] %v806
        %823 = vst [vmem:[%s551 + $0x18] sm:$0xf] %v807
        %824 = vst [vmem:[%s551 + $0x1c] sm:$0xf] %v808
        %v825 = vld [vmem:[#allocation10] sm:$0xf]
        %v826 = vld [vmem:[#allocation10 + $0x4] sm:$0xf]
        %v827 = vld [vmem:[#allocation10 + $0x8] sm:$0xf]
        %v828 = vld [vmem:[#allocation10 + $0xc] sm:$0xf]
        %v829 = vld [vmem:[#allocation10 + $0x10] sm:$0xf]
        %v830 = vld [vmem:[#allocation10 + $0x14] sm:$0xf]
        %v831 = vld [vmem:[#allocation10 + $0x18] sm:$0xf]
        %v832 = vld [vmem:[#allocation10 + $0x1c] sm:$0xf]
        %v833 = vld [vmem:[#allocation10 + $0x20] sm:$0xf]
        %v834 = vld [vmem:[#allocation10 + $0x24] sm:$0xf]
        %v835 = vld [vmem:[#allocation10 + $0x28] sm:$0xf]
        %v836 = vld [vmem:[#allocation10 + $0x2c] sm:$0xf]
        %v837 = vld [vmem:[#allocation10 + $0x30] sm:$0xf]
        %v838 = vld [vmem:[#allocation10 + $0x34] sm:$0xf]
        %v839 = vld [vmem:[#allocation10 + $0x38] sm:$0xf]
        %v840 = vld [vmem:[#allocation10 + $0x3c] sm:$0xf]
        %v841 = vld [vmem:[%s6] sm:$0x1]
        %v843 = vlaneseq
        %v844 = vshrl.u32 %v843, 7
        %v845 = vsub.s32 0, %v844
        %v846 = vrot.slane %v841, %v845
        %v864 = vunpack.c.l.b16 %v825
        %v865 = vunpack.c.l.b16 %v826
        %v866 = vunpack.c.l.b16 %v827
        %v867 = vunpack.c.l.b16 %v828
        %v868 = vunpack.c.l.b16 %v829
        %v869 = vunpack.c.l.b16 %v830
        %v870 = vunpack.c.l.b16 %v831
        %v871 = vunpack.c.l.b16 %v832
        %v872 = vunpack.c.l.b16 %v833
        %v873 = vunpack.c.l.b16 %v834
        %v874 = vunpack.c.l.b16 %v835
        %v875 = vunpack.c.l.b16 %v836
        %v876 = vunpack.c.l.b16 %v837
        %v877 = vunpack.c.l.b16 %v838
        %v878 = vunpack.c.l.b16 %v839
        %v879 = vunpack.c.l.b16 %v840
        %v880 = vpack.c.b16 %v865, %v864
        %v881 = vpack.c.b16 %v867, %v866
        %v882 = vpack.c.b16 %v869, %v868
        %v883 = vpack.c.b16 %v871, %v870
        %v884 = vpack.c.b16 %v873, %v872
        %v885 = vpack.c.b16 %v875, %v874
        %v886 = vpack.c.b16 %v877, %v876
        %v887 = vpack.c.b16 %v879, %v878
        %896 = vmatprep.subr.bf16.mxu0 0
        %897 = vmatpush1.bf16.msra.mxu0 %v880
        %898 = vmatprep.subr.bf16.mxu0 0
        %899 = vmatpush1.bf16.msra.mxu0 %v881
        %900 = vmatprep.subr.bf16.mxu0 0
        %901 = vmatpush1.bf16.msra.mxu0 %v882
        %902 = vmatprep.subr.bf16.mxu0 0
        %903 = vmatpush1.bf16.msra.mxu0 %v883
        %904 = vmatprep.subr.bf16.mxu0 0
        %905 = vmatpush1.bf16.msra.mxu0 %v884
        %906 = vmatprep.subr.bf16.mxu0 0
        %907 = vmatpush1.bf16.msra.mxu0 %v885
        %908 = vmatprep.subr.bf16.mxu0 0
        %909 = vmatpush1.bf16.msra.mxu0 %v886
        %910 = vmatprep.subr.bf16.mxu0 0
        %911 = vmatpush1.bf16.msra.mxu0 %v887
        %912 = vmatprep.subr.bf16.mxu0 0
        %913 = vmatpush1.bf16.msra.mxu0 0
        %914 = vmatprep.subr.bf16.mxu0 0
        %915 = vmatpush1.bf16.msra.mxu0 0
        %916 = vmatprep.subr.bf16.mxu0 0
        %917 = vmatpush1.bf16.msra.mxu0 0
        %918 = vmatprep.subr.bf16.mxu0 0
        %919 = vmatpush1.bf16.msra.mxu0 0
        %920 = vmatprep.subr.bf16.mxu0 0
        %921 = vmatpush1.bf16.msra.mxu0 0
        %922 = vmatprep.subr.bf16.mxu0 0
        %923 = vmatpush1.bf16.msra.mxu0 0
        %924 = vmatprep.subr.bf16.mxu0 0
        %925 = vmatpush1.bf16.msra.mxu0 0
        %926 = vmatprep.subr.bf16.mxu0 0
        %927 = vmatpush1.bf16.msra.mxu0 0
        %928 = vmatprep.mubr.bf16.mxu0 0
        %929 = vmatmul.mubr.bf16.gmra.mrb[0].mxu0 %v581
        %v930 = vpop.f32.mrb[0].mxu0
        %v931 = vadd.f32 %v846, %v930
        %v932 = vpop.f32.mrb[0].mxu0
        %v933 = vpop.f32.mrb[0].mxu0
        %v934 = vadd.f32 %v846, %v933
        %v935 = vpop.f32.mrb[0].mxu0
        %936 = vmatprep.mubr.bf16.mxu0 0
        %937 = vmatmul.mubr.bf16.gmra.mrb[0].mxu0 %v582
        %v938 = vpop.f32.mrb[0].mxu0
        %v939 = vadd.f32 %v846, %v938
        %v940 = vpop.f32.mrb[0].mxu0
        %v941 = vpop.f32.mrb[0].mxu0
        %v942 = vadd.f32 %v846, %v941
        %v943 = vpop.f32.mrb[0].mxu0
        %944 = vmatprep.mubr.bf16.mxu0 0
        %945 = vmatmul.mubr.bf16.gmra.mrb[0].mxu0 %v583
        %v946 = vpop.f32.mrb[0].mxu0
        %v947 = vadd.f32 %v846, %v946
        %v948 = vpop.f32.mrb[0].mxu0
        %v949 = vpop.f32.mrb[0].mxu0
        %v950 = vadd.f32 %v846, %v949
        %v951 = vpop.f32.mrb[0].mxu0
        %952 = vmatprep.mubr.bf16.mxu0 0
        %953 = vmatmul.mubr.bf16.gmra.mrb[0].mxu0 %v584
        %v954 = vpop.f32.mrb[0].mxu0
        %v955 = vadd.f32 %v846, %v954
        %v956 = vpop.f32.mrb[0].mxu0
        %v957 = vpop.f32.mrb[0].mxu0
        %v958 = vadd.f32 %v846, %v957
        %v959 = vpop.f32.mrb[0].mxu0
        %960 = vdwg.mxu0
        %v961 = vmul.f32 %v931, %v585
        %v962 = vmul.f32 %v934, %v586
        %v963 = vmul.f32 %v939, %v587
        %v964 = vmul.f32 %v942, %v588
        %v965 = vmul.f32 %v947, %v589
        %v966 = vmul.f32 %v950, %v590
        %v967 = vmul.f32 %v955, %v591
        %v968 = vmul.f32 %v958, %v592
        %969 = vrot.lane.b32.xlu0 %v931, 64
        %v970 = vpop.permute.xlu0 %969
        %971 = vrot.lane.b32.xlu0 %v934, 64
        %v972 = vpop.permute.xlu0 %971
        %973 = vrot.lane.b32.xlu0 %v939, 64
        %v974 = vpop.permute.xlu0 %973
        %975 = vrot.lane.b32.xlu0 %v942, 64
        %v976 = vpop.permute.xlu0 %975
        %977 = vrot.lane.b32.xlu0 %v947, 64
        %v978 = vpop.permute.xlu0 %977
        %979 = vrot.lane.b32.xlu0 %v950, 64
        %v980 = vpop.permute.xlu0 %979
        %981 = vrot.lane.b32.xlu0 %v955, 64
        %v982 = vpop.permute.xlu0 %981
        %983 = vrot.lane.b32.xlu0 %v958, 64
        %v984 = vpop.permute.xlu0 %983
        %v985 = vmul.f32 %v970, %v593
        %v986 = vmul.f32 %v972, %v594
        %v987 = vmul.f32 %v974, %v595
        %v988 = vmul.f32 %v976, %v596
        %v989 = vmul.f32 %v978, %v597
        %v990 = vmul.f32 %v980, %v598
        %v991 = vmul.f32 %v982, %v599
        %v992 = vmul.f32 %v984, %v600
        %v993 = vadd.f32 %v961, %v985
        %v994 = vadd.f32 %v962, %v986
        %v995 = vadd.f32 %v963, %v987
        %v996 = vadd.f32 %v964, %v988
        %v997 = vadd.f32 %v965, %v989
        %v998 = vadd.f32 %v966, %v990
        %v999 = vadd.f32 %v967, %v991
        %v1000 = vadd.f32 %v968, %v992
        %v1001 = vpack.c.bf16 %v994, %v993
        %v1002 = vpack.c.bf16 %v996, %v995
        %v1003 = vpack.c.bf16 %v998, %v997
        %v1004 = vpack.c.bf16 %v1000, %v999
        %v1009 = vunpack.c.l.b16 %v1001
        %v1010 = vunpack.c.h.b16 %v1001
        %v1011 = vunpack.c.l.b16 %v1002
        %v1012 = vunpack.c.h.b16 %v1002
        %v1013 = vunpack.c.l.b16 %v1003
        %v1014 = vunpack.c.h.b16 %v1003
        %v1015 = vunpack.c.l.b16 %v1004
        %v1016 = vunpack.c.h.b16 %v1004
        %v1017 = vpack.c.b16 %v1009, %v1009
        %v1018 = vpack.c.b16 %v1010, %v1010
        %v1019 = vpack.c.b16 %v1011, %v1011
        %v1020 = vpack.c.b16 %v1012, %v1012
        %v1021 = vpack.c.b16 %v1013, %v1013
        %v1022 = vpack.c.b16 %v1014, %v1014
        %v1023 = vpack.c.b16 %v1015, %v1015
        %v1024 = vpack.c.b16 %v1016, %v1016
        %1033 = vst [vmem:[%s558] sm:$0xf] %v1017
        %1034 = vst [vmem:[%s558 + $0x4] sm:$0xf] %v1018
        %1035 = vst [vmem:[%s558 + $0x8] sm:$0xf] %v1019
        %1036 = vst [vmem:[%s558 + $0xc] sm:$0xf] %v1020
        %1037 = vst [vmem:[%s558 + $0x10] sm:$0xf] %v1021
        %1038 = vst [vmem:[%s558 + $0x14] sm:$0xf] %v1022
        %1039 = vst [vmem:[%s558 + $0x18] sm:$0xf] %v1023
        %1040 = vst [vmem:[%s558 + $0x1c] sm:$0xf] %v1024
        %v1041 = vld [vmem:[#allocation11] sm:$0xf]
        %v1042 = vld [vmem:[#allocation11 + $0x4] sm:$0xf]
        %v1043 = vld [vmem:[#allocation11 + $0x8] sm:$0xf]
        %v1044 = vld [vmem:[#allocation11 + $0xc] sm:$0xf]
        %v1045 = vld [vmem:[#allocation11 + $0x10] sm:$0xf]
        %v1046 = vld [vmem:[#allocation11 + $0x14] sm:$0xf]
        %v1047 = vld [vmem:[#allocation11 + $0x18] sm:$0xf]
        %v1048 = vld [vmem:[#allocation11 + $0x1c] sm:$0xf]
        %v1049 = vld [vmem:[#allocation11 + $0x20] sm:$0xf]
        %v1050 = vld [vmem:[#allocation11 + $0x24] sm:$0xf]
        %v1051 = vld [vmem:[#allocation11 + $0x28] sm:$0xf]
        %v1052 = vld [vmem:[#allocation11 + $0x2c] sm:$0xf]
        %v1053 = vld [vmem:[#allocation11 + $0x30] sm:$0xf]
        %v1054 = vld [vmem:[#allocation11 + $0x34] sm:$0xf]
        %v1055 = vld [vmem:[#allocation11 + $0x38] sm:$0xf]
        %v1056 = vld [vmem:[#allocation11 + $0x3c] sm:$0xf]
        %v1057 = vld [vmem:[%s8] sm:$0x1]
        %v1059 = vlaneseq
        %v1060 = vshrl.u32 %v1059, 7
        %v1061 = vsub.s32 0, %v1060
        %v1062 = vrot.slane %v1057, %v1061
        %v1080 = vunpack.c.l.b16 %v1041
        %v1081 = vunpack.c.l.b16 %v1042
        %v1082 = vunpack.c.l.b16 %v1043
        %v1083 = vunpack.c.l.b16 %v1044
        %v1084 = vunpack.c.l.b16 %v1045
        %v1085 = vunpack.c.l.b16 %v1046
        %v1086 = vunpack.c.l.b16 %v1047
        %v1087 = vunpack.c.l.b16 %v1048
        %v1088 = vunpack.c.l.b16 %v1049
        %v1089 = vunpack.c.l.b16 %v1050
        %v1090 = vunpack.c.l.b16 %v1051
        %v1091 = vunpack.c.l.b16 %v1052
        %v1092 = vunpack.c.l.b16 %v1053
        %v1093 = vunpack.c.l.b16 %v1054
        %v1094 = vunpack.c.l.b16 %v1055
        %v1095 = vunpack.c.l.b16 %v1056
        %v1096 = vpack.c.b16 %v1081, %v1080
        %v1097 = vpack.c.b16 %v1083, %v1082
        %v1098 = vpack.c.b16 %v1085, %v1084
        %v1099 = vpack.c.b16 %v1087, %v1086
        %v1100 = vpack.c.b16 %v1089, %v1088
        %v1101 = vpack.c.b16 %v1091, %v1090
        %v1102 = vpack.c.b16 %v1093, %v1092
        %v1103 = vpack.c.b16 %v1095, %v1094
        %1112 = vmatprep.subr.bf16.mxu0 0
        %1113 = vmatpush1.bf16.msra.mxu0 %v1096
        %1114 = vmatprep.subr.bf16.mxu0 0
        %1115 = vmatpush1.bf16.msra.mxu0 %v1097
        %1116 = vmatprep.subr.bf16.mxu0 0
        %1117 = vmatpush1.bf16.msra.mxu0 %v1098
        %1118 = vmatprep.subr.bf16.mxu0 0
        %1119 = vmatpush1.bf16.msra.mxu0 %v1099
        %1120 = vmatprep.subr.bf16.mxu0 0
        %1121 = vmatpush1.bf16.msra.mxu0 %v1100
        %1122 = vmatprep.subr.bf16.mxu0 0
        %1123 = vmatpush1.bf16.msra.mxu0 %v1101
        %1124 = vmatprep.subr.bf16.mxu0 0
        %1125 = vmatpush1.bf16.msra.mxu0 %v1102
        %1126 = vmatprep.subr.bf16.mxu0 0
        %1127 = vmatpush1.bf16.msra.mxu0 %v1103
        %1128 = vmatprep.subr.bf16.mxu0 0
        %1129 = vmatpush1.bf16.msra.mxu0 0
        %1130 = vmatprep.subr.bf16.mxu0 0
        %1131 = vmatpush1.bf16.msra.mxu0 0
        %1132 = vmatprep.subr.bf16.mxu0 0
        %1133 = vmatpush1.bf16.msra.mxu0 0
        %1134 = vmatprep.subr.bf16.mxu0 0
        %1135 = vmatpush1.bf16.msra.mxu0 0
        %1136 = vmatprep.subr.bf16.mxu0 0
        %1137 = vmatpush1.bf16.msra.mxu0 0
        %1138 = vmatprep.subr.bf16.mxu0 0
        %1139 = vmatpush1.bf16.msra.mxu0 0
        %1140 = vmatprep.subr.bf16.mxu0 0
        %1141 = vmatpush1.bf16.msra.mxu0 0
        %1142 = vmatprep.subr.bf16.mxu0 0
        %1143 = vmatpush1.bf16.msra.mxu0 0
        %1144 = vmatprep.mubr.bf16.mxu0 0
        %1145 = vmatmul.mubr.bf16.gmra.mrb[0].mxu0 %v581
        %v1146 = vpop.f32.mrb[0].mxu0
        %v1147 = vadd.f32 %v1062, %v1146
        %v1148 = vpop.f32.mrb[0].mxu0
        %v1149 = vpop.f32.mrb[0].mxu0
        %v1150 = vadd.f32 %v1062, %v1149
        %v1151 = vpop.f32.mrb[0].mxu0
        %1152 = vmatprep.mubr.bf16.mxu0 0
        %1153 = vmatmul.mubr.bf16.gmra.mrb[0].mxu0 %v582
        %v1154 = vpop.f32.mrb[0].mxu0
        %v1155 = vadd.f32 %v1062, %v1154
        %v1156 = vpop.f32.mrb[0].mxu0
        %v1157 = vpop.f32.mrb[0].mxu0
        %v1158 = vadd.f32 %v1062, %v1157
        %v1159 = vpop.f32.mrb[0].mxu0
        %1160 = vmatprep.mubr.bf16.mxu0 0
        %1161 = vmatmul.mubr.bf16.gmra.mrb[0].mxu0 %v583
        %v1162 = vpop.f32.mrb[0].mxu0
        %v1163 = vadd.f32 %v1062, %v1162
        %v1164 = vpop.f32.mrb[0].mxu0
        %v1165 = vpop.f32.mrb[0].mxu0
        %v1166 = vadd.f32 %v1062, %v1165
        %v1167 = vpop.f32.mrb[0].mxu0
        %1168 = vmatprep.mubr.bf16.mxu0 0
        %1169 = vmatmul.mubr.bf16.gmra.mrb[0].mxu0 %v584
        %v1170 = vpop.f32.mrb[0].mxu0
        %v1171 = vadd.f32 %v1062, %v1170
        %v1172 = vpop.f32.mrb[0].mxu0
        %v1173 = vpop.f32.mrb[0].mxu0
        %v1174 = vadd.f32 %v1062, %v1173
        %v1175 = vpop.f32.mrb[0].mxu0
        %1176 = vdwg.mxu0
        %v1177 = vpack.c.bf16 %v1150, %v1147
        %v1178 = vpack.c.bf16 %v1158, %v1155
        %v1179 = vpack.c.bf16 %v1166, %v1163
        %v1180 = vpack.c.bf16 %v1174, %v1171
        %v1185 = vunpack.c.l.b16 %v1177
        %v1186 = vunpack.c.h.b16 %v1177
        %v1187 = vunpack.c.l.b16 %v1178
        %v1188 = vunpack.c.h.b16 %v1178
        %v1189 = vunpack.c.l.b16 %v1179
        %v1190 = vunpack.c.h.b16 %v1179
        %v1191 = vunpack.c.l.b16 %v1180
        %v1192 = vunpack.c.h.b16 %v1180
        %v1193 = vpack.c.b16 %v1185, %v1185
        %v1194 = vpack.c.b16 %v1186, %v1186
        %v1195 = vpack.c.b16 %v1187, %v1187
        %v1196 = vpack.c.b16 %v1188, %v1188
        %v1197 = vpack.c.b16 %v1189, %v1189
        %v1198 = vpack.c.b16 %v1190, %v1190
        %v1199 = vpack.c.b16 %v1191, %v1191
        %v1200 = vpack.c.b16 %v1192, %v1192
        %1209 = vst [vmem:[%s565] sm:$0xf] %v1193
        %1210 = vst [vmem:[%s565 + $0x4] sm:$0xf] %v1194
        %1211 = vst [vmem:[%s565 + $0x8] sm:$0xf] %v1195
        %1212 = vst [vmem:[%s565 + $0xc] sm:$0xf] %v1196
        %1213 = vst [vmem:[%s565 + $0x10] sm:$0xf] %v1197
        %1214 = vst [vmem:[%s565 + $0x14] sm:$0xf] %v1198
        %1215 = vst [vmem:[%s565 + $0x18] sm:$0xf] %v1199
        %1216 = vst [vmem:[%s565 + $0x1c] sm:$0xf] %v1200
        %s1217 = sand.u32 %s265, 1
        %s1218 = scalar_lea.sflag [#allocation4], %s1217
        %s1219 = sand.u32 %s265, 1
        %s1220 = smul.addr %s1219, 32
        %s1221 = scalar_lea.vmem [#allocation13], %s1220
        %s1222 = sand.u32 %s37, 1
        %s1223 = scalar_lea.sflag [#allocation15], %s1222
        %s1224 = sand.u32 %s293, 1
        %s1225 = smul.addr %s1224, 32
        %s1226 = scalar_lea.vmem [#allocation14], %s1225
        %s1227 = sand.u32 %s37, 1
        %s1228 = scalar_lea.sflag [#allocation15], %s1227
        %s1229 = sand.u32 %s321, 1
        %s1230 = smul.addr %s1229, 32
        %s1231 = scalar_lea.vmem [#allocation16], %s1230
        // Predicated region
        $region81: #{tpu_custom_call.1} parent=55 // pred_check
          %p1232 = pneg %p275
        $region82: #{tpu_custom_call.1} parent=55 // pred_check_branch
          %1234 = sbr.rel (%p1232) target = $region84
        $region83: #{tpu_custom_call.1} parent=55 // pred_region
          %s1235 = smul.u32 8, %s42
          %s1237 = ssub.s32 512, 512
          %1238 = vsyncadd %s1218, %s1237
          %s1239 = smul.addr %s41, 16
          %s1240 = sadd.s32 %s1235, %s1239
          %s1241 = smul.addr %s1240, 64
          %s1242 = scalar_lea.hbm %s9, %s1241
          %s1243 = sshll.u32 %s1221, 4
          %s1244 = int_to_ptr.vmem [resolvable:$true] %s1243
          %1249 = dma.vmem_to_hbm [thread:$0]  %s1244, 512, %s1242, %s1218, 64, 64, 4
        $region84: #{tpu_custom_call.1} parent=55 // pred_fallthru
          _
        // Predicated region
        $region85: #{tpu_custom_call.1} parent=55 // pred_check
          %p1250 = pneg %p303
        $region86: #{tpu_custom_call.1} parent=55 // pred_check_branch
          %1252 = sbr.rel (%p1250) target = $region88
        $region87: #{tpu_custom_call.1} parent=55 // pred_region
          %s1253 = smul.u32 8, %s42
          %s1255 = ssub.s32 512, 512
          %1256 = vsyncadd %s1223, %s1255
          %s1257 = smul.addr %s41, 16
          %s1258 = sadd.s32 %s1253, %s1257
          %s1259 = smul.addr %s1258, 64
          %s1260 = scalar_lea.hbm %s10, %s1259
          %s1261 = sshll.u32 %s1226, 4
          %s1262 = int_to_ptr.vmem [resolvable:$true] %s1261
          %1267 = dma.vmem_to_hbm [thread:$0]  %s1262, 512, %s1260, %s1223, 64, 64, 4
        $region88: #{tpu_custom_call.1} parent=55 // pred_fallthru
          _
        // Predicated region
        $region89: #{tpu_custom_call.1} parent=55 // pred_check
          %p1268 = pneg %p331
        $region90: #{tpu_custom_call.1} parent=55 // pred_check_branch
          %1270 = sbr.rel (%p1268) target = $region92
        $region91: #{tpu_custom_call.1} parent=55 // pred_region
          %s1271 = smul.u32 8, %s42
          %s1273 = ssub.s32 512, 512
          %1274 = vsyncadd %s1228, %s1273
          %s1275 = smul.addr %s41, 16
          %s1276 = sadd.s32 %s1271, %s1275
          %s1277 = smul.addr %s1276, 64
          %s1278 = scalar_lea.hbm %s11, %s1277
          %s1279 = sshll.u32 %s1231, 4
          %s1280 = int_to_ptr.vmem [resolvable:$true] %s1279
          %1285 = dma.vmem_to_hbm [thread:$0]  %s1280, 512, %s1278, %s1228, 64, 64, 4
        $region92: #{tpu_custom_call.1} parent=55 // pred_fallthru
          _
      $region56: #{tpu_custom_call.1} parent=5 // pred_fallthru
        _
      %p1286 = scmp.le.s32.totalorder 2, %s32
      // Predicated region
      $region93: #{tpu_custom_call.1} parent=5 // pred_check
        %p1287 = pneg %p1286
      $region94: #{tpu_custom_call.1} parent=5 // pred_check_branch
        %1289 = sbr.rel (%p1287) target = $region96
      $region95: #{tpu_custom_call.1} parent=5 // pred_region
        %s1290 = ssub.s32 %s32, 2
        // Predicated region
        $region97: #{tpu_custom_call.1} parent=95 // pred_check
          %p1291 = pneg %p281
        $region98: #{tpu_custom_call.1} parent=95 // pred_check_branch
          %1293 = sbr.rel (%p1291) target = $region100
        $region99: #{tpu_custom_call.1} parent=95 // pred_region
          %s1294 = sand.u32 %s266, 1
          %s1295 = scalar_lea.sflag [#allocation4], %s1294
          %s1296 = sand.u32 %s266, 1
          %s1297 = smul.addr %s1296, 32
          %s1298 = scalar_lea.vmem [#allocation13], %s1297
          %1299 = dma.done %s1295, 512
        $region100: #{tpu_custom_call.1} parent=95 // pred_fallthru
          _
        // Predicated region
        $region101: #{tpu_custom_call.1} parent=95 // pred_check
          %p1300 = pneg %p309
        $region102: #{tpu_custom_call.1} parent=95 // pred_check_branch
          %1302 = sbr.rel (%p1300) target = $region104
        $region103: #{tpu_custom_call.1} parent=95 // pred_region
          %s1303 = sand.u32 %s38, 1
          %s1304 = scalar_lea.sflag [#allocation15], %s1303
          %s1305 = sand.u32 %s294, 1
          %s1306 = smul.addr %s1305, 32
          %s1307 = scalar_lea.vmem [#allocation14], %s1306
          %1308 = dma.done %s1304, 512
        $region104: #{tpu_custom_call.1} parent=95 // pred_fallthru
          _
        // Predicated region
        $region105: #{tpu_custom_call.1} parent=95 // pred_check
          %p1309 = pneg %p337
        $region106: #{tpu_custom_call.1} parent=95 // pred_check_branch
          %1311 = sbr.rel (%p1309) target = $region108
        $region107: #{tpu_custom_call.1} parent=95 // pred_region
          %s1312 = sand.u32 %s38, 1
          %s1313 = scalar_lea.sflag [#allocation15], %s1312
          %s1314 = sand.u32 %s322, 1
          %s1315 = smul.addr %s1314, 32
          %s1316 = scalar_lea.vmem [#allocation16], %s1315
          %1317 = dma.done %s1313, 512
        $region108: #{tpu_custom_call.1} parent=95 // pred_fallthru
          _
      $region96: #{tpu_custom_call.1} parent=5 // pred_fallthru
        _
    $region6: #{tpu_custom_call.1} parent=1 // loop_footer
      %s36 = sadd.s32 1, %s32
    $region7: #{tpu_custom_call.1} parent=1 // loop_footer_branch
      %31 = sbr.rel target = $region3
    $region8: #{tpu_custom_call.1} parent=1 // loop_exit
      _
    %1318 = vsyncpa [#allocation3], 1
    %s1319 = scalar_lea.sflag [#allocation3], 1
    %1320 = vsyncpa %s1319, 1
    %1321 = vsyncpa [#allocation6], 1
    %s1322 = scalar_lea.sflag [#allocation6], 1
    %1323 = vsyncpa %s1322, 1
    %1324 = vsyncpa [#allocation9], 1
    %1325 = vsyncpa [#allocation12], 1
    %1326 = vsyncpa [#allocation4], 1
    %s1327 = scalar_lea.sflag [#allocation4], 1
    %1328 = vsyncpa %s1327, 1
    %1329 = vsyncpa [#allocation15], 1
    %s1330 = scalar_lea.sflag [#allocation15], 1
    %1331 = vsyncpa %s1330, 1

</llo_original>
